<compile_context>
chip_gen: v7x
topology: tpu7x:2x2x1
jax: 0.10.0
libtpu: 0.0.40
codegen_flags: <defaults>
</compile_context>

<pallas_src>
import functools
import math

import jax
import jax.numpy as jnp
from jax import lax
from jax.experimental import pallas as pl
from jax.experimental.pallas import tpu as pltpu


# ----------------------------------------------------------------------------
# Pass 1: fused Q/K/V input projections (flattened rows x (dim, dim) weights).
# ----------------------------------------------------------------------------
def qkv_proj_kernel(q_ref, k_ref, v_ref, wq_ref, wk_ref, wv_ref,
                    qo_ref, ko_ref, vo_ref):
    qo_ref[...] = jnp.dot(q_ref[...], wq_ref[...],
                          preferred_element_type=jnp.float32).astype(qo_ref.dtype)
    ko_ref[...] = jnp.dot(k_ref[...], wk_ref[...],
                          preferred_element_type=jnp.float32).astype(ko_ref.dtype)
    vo_ref[...] = jnp.dot(v_ref[...], wv_ref[...],
                          preferred_element_type=jnp.float32).astype(vo_ref.dtype)


def _qkv_projection(qf, kf, vf, wq_s, wk_c, wv_c, *, compute_dtype, single_buffer):
    R, dim = qf.shape
    tm = next((t for t in (512, 256, 128, 64, 32, 16, 8) if R % t == 0), R)

    inv_kw = {"pipeline_mode": pl.Buffered(buffer_count=1)} if single_buffer else {}
    itemsize = jnp.dtype(compute_dtype).itemsize
    w_bufs = 1 if single_buffer else 2
    vmem_est = (2 * 3 * tm * dim + 2 * 3 * tm * dim
                + w_bufs * 3 * dim * dim) * itemsize
    vmem_limit = int(min(100 << 20, max(32 << 20, vmem_est * 3 // 2 + (8 << 20))))

    cost = pl.CostEstimate(
        flops=int(3 * 2 * R * dim * dim),
        transcendentals=0,
        bytes_accessed=int((6 * R * dim + 3 * dim * dim) * itemsize))

    grid_spec = pltpu.PrefetchScalarGridSpec(
        num_scalar_prefetch=0,
        grid=(R // tm,),
        in_specs=[
            pl.BlockSpec((tm, dim), lambda i: (i, 0)),                 # q rows
            pl.BlockSpec((tm, dim), lambda i: (i, 0)),                 # k rows
            pl.BlockSpec((tm, dim), lambda i: (i, 0)),                 # v rows
            pl.BlockSpec((dim, dim), lambda i: (0, 0), **inv_kw),      # Wq (scaled)
            pl.BlockSpec((dim, dim), lambda i: (0, 0), **inv_kw),      # Wk
            pl.BlockSpec((dim, dim), lambda i: (0, 0), **inv_kw),      # Wv
        ],
        out_specs=[
            pl.BlockSpec((tm, dim), lambda i: (i, 0)),
            pl.BlockSpec((tm, dim), lambda i: (i, 0)),
            pl.BlockSpec((tm, dim), lambda i: (i, 0)),
        ],
    )

    out_shape = tuple(jax.ShapeDtypeStruct((R, dim), compute_dtype) for _ in range(3))
    return pl.pallas_call(
        qkv_proj_kernel,
        out_shape=out_shape,
        grid_spec=grid_spec,
        compiler_params=pltpu.CompilerParams(
            dimension_semantics=("parallel",),
            vmem_limit_bytes=vmem_limit),
        cost_estimate=cost,
    )(qf, kf, vf, wq_s, wk_c, wv_c)


# ----------------------------------------------------------------------------
# Pass 2: attention over head-major projections + fused output projection.
# ----------------------------------------------------------------------------
def mha_attn_kernel(qph_ref, kph_ref, vph_ref, mask_ref, wo_ref,
                    o_ref, att_scr, *, heads, depth, compute_dtype, approx_recip):
    # Static head loop (heads is small here); head slices are leading-axis
    # views of the head-major blocks -> no per-head lane relayout.
    for h in range(heads):
        qh = qph_ref[0, h]                                  # (TQ, depth)
        kh = kph_ref[0, h]                                  # (S,  depth)
        vh = vph_ref[0, h]                                  # (S,  depth)

        # QK^T without materializing a transpose (1/sqrt(depth) already folded
        # into the Q projection weights).
        g = lax.dot_general(qh, kh, (((1,), (1,)), ((), ())),
                            preferred_element_type=jnp.float32)      # (TQ, S)

        # Additive masking from the compact int8 (0/1) mask, applied in f32
        # in-kernel; re-read from the ref per head to keep live ranges short.
        g = g - mask_ref[0, 0].astype(jnp.float32) * 1e9

        # Numerically stable softmax; normalization deferred to the
        # (TQ, depth) head output (factor S/depth less VALU work).
        g_max = jnp.max(g, axis=-1, keepdims=True)
        e = jnp.exp(g - g_max)
        denom = jnp.sum(e, axis=-1, keepdims=True)

        att_h = jnp.dot(e.astype(compute_dtype), vh,
                        preferred_element_type=jnp.float32)          # (TQ, depth)
        att_h = att_h * pl.reciprocal(denom, approx=approx_recip)

        # Stage the head output in VMEM (head-major slot of the (TQ, dim) row).
        att_scr[:, h * depth:(h + 1) * depth] = att_h.astype(att_scr.dtype)

    # Single fused output projection: full dim contraction on the MXU.
    o_ref[0] = jnp.dot(att_scr[...], wo_ref[...],
                       preferred_element_type=jnp.float32).astype(o_ref.dtype)


def _attention(qph, kph, vph, mask_i8, wo_c, *, heads, depth, q_tile,
               compute_dtype, out_dtype, single_buffer):
    B, _, S, _ = qph.shape
    dim = heads * depth
    nq = S // q_tile
    approx_recip = compute_dtype == jnp.bfloat16

    kernel = functools.partial(
        mha_attn_kernel, heads=heads, depth=depth,
        compute_dtype=compute_dtype, approx_recip=approx_recip)

    inv_kw = {"pipeline_mode": pl.Buffered(buffer_count=1)} if single_buffer else {}

    # VMEM budget derived from actual block sizes (lane-padded depth).
    itemsize = jnp.dtype(compute_dtype).itemsize
    out_itemsize = jnp.dtype(out_dtype).itemsize
    pdepth = -(-depth // 128) * 128
    kv_bufs = 1 if single_buffer else 2
    w_bufs = 1 if single_buffer else 2
    vmem_est = (2 * heads * q_tile * pdepth * itemsize            # q blocks (x2 buf)
                + 2 * kv_bufs * heads * S * pdepth * itemsize     # k + v blocks
                + 2 * q_tile * S * 1                              # int8 mask blocks
                + w_bufs * dim * dim * itemsize                   # Wo
                + 2 * q_tile * dim * out_itemsize                 # output blocks
                + q_tile * dim * itemsize)                        # att scratch
    vmem_limit = int(min(100 << 20, max(32 << 20, vmem_est * 3 // 2 + (8 << 20))))

    cost = pl.CostEstimate(
        flops=int(2 * 2 * B * heads * S * S * depth + 2 * B * S * dim * dim),
        transcendentals=int(B * heads * S * S),
        bytes_accessed=int(3 * B * heads * S * depth * itemsize
                           + B * S * S
                           + dim * dim * itemsize
                           + B * S * dim * out_itemsize))

    grid_spec = pltpu.PrefetchScalarGridSpec(
        num_scalar_prefetch=0,
        grid=(B, nq),
        in_specs=[
            pl.BlockSpec((1, heads, q_tile, depth), lambda b, i: (b, 0, i, 0)),
            pl.BlockSpec((1, heads, S, depth), lambda b, i: (b, 0, 0, 0), **inv_kw),
            pl.BlockSpec((1, heads, S, depth), lambda b, i: (b, 0, 0, 0), **inv_kw),
            pl.BlockSpec((1, 1, q_tile, S), lambda b, i: (b, 0, i, 0)),
            pl.BlockSpec((dim, dim), lambda b, i: (0, 0), **inv_kw),
        ],
        out_specs=pl.BlockSpec((1, q_tile, dim), lambda b, i: (b, i, 0)),
        scratch_shapes=[pltpu.VMEM((q_tile, dim), compute_dtype)],
    )

    return pl.pallas_call(
        kernel,
        out_shape=jax.ShapeDtypeStruct((B, S, dim), out_dtype),
        grid_spec=grid_spec,
        compiler_params=pltpu.CompilerParams(
            # No cross-step scratch carry -> both axes can feed the megacore.
            dimension_semantics=("parallel", "parallel"),
            vmem_limit_bytes=vmem_limit),
        cost_estimate=cost,
    )(qph, kph, vph, mask_i8, wo_c)


# ----------------------------------------------------------------------------
# Public wrapper (matches MHAttention.forward semantics).
# ----------------------------------------------------------------------------
def mh_attention(q, k, v, mask, wq, wk, wv, wo, *, heads, q_tile=None,
                 compute_dtype=jnp.float32, single_buffer_invariants=True):
    B, S, dim = q.shape
    assert dim % heads == 0
    depth = dim // heads
    out_dtype = q.dtype

    if q_tile is None:
        q_tile = min(S, 256)
    assert S % q_tile == 0, "q_tile must divide S"
    sub = 16 if compute_dtype == jnp.bfloat16 else 8
    assert q_tile == S or q_tile % sub == 0, (
        "q_tile must be a multiple of %d (sublane packing)" % sub)

    # One-time host prep: fold 1/sqrt(depth) into Wq, cast matmul operands to
    # the compute dtype (f32 accumulation stays in-kernel), binarize the mask
    # to int8 (typical padding/causal masks; S^2 bytes of HBM traffic).
    inv_norm = 1.0 / math.sqrt(depth)
    wq_s = (wq.astype(jnp.float32) * inv_norm).astype(compute_dtype)
    wk_c = wk.astype(compute_dtype)
    wv_c = wv.astype(compute_dtype)
    wo_c = wo.astype(compute_dtype)
    qf = q.reshape(B * S, dim).astype(compute_dtype)
    kf = k.reshape(B * S, dim).astype(compute_dtype)
    vf = v.reshape(B * S, dim).astype(compute_dtype)
    mask_i8 = (mask != 0).astype(jnp.int8)

    def run(single_buffer):
        qp, kp, vp = _qkv_projection(qf, kf, vf, wq_s, wk_c, wv_c,
                                     compute_dtype=compute_dtype,
                                     single_buffer=single_buffer)
        # One-time head-major relayout (layout plumbing, done by XLA):
        # (B*S, dim) -> (B, heads, S, depth) so the hot loop never lane-slices.
        qph = qp.reshape(B, S, heads, depth).transpose(0, 2, 1, 3)
        kph = kp.reshape(B, S, heads, depth).transpose(0, 2, 1, 3)
        vph = vp.reshape(B, S, heads, depth).transpose(0, 2, 1, 3)
        return _attention(qph, kph, vph, mask_i8, wo_c,
                          heads=heads, depth=depth, q_tile=q_tile,
                          compute_dtype=compute_dtype, out_dtype=out_dtype,
                          single_buffer=single_buffer)

    try:
        return run(single_buffer_invariants)
    except Exception:
        if not single_buffer_invariants:
            raise
        # Fallback if this Pallas build rejects pipeline_mode / Buffered(1).
        return run(False)


# ----------------------------------------------------------------------------
# Reference & test harness.
# ----------------------------------------------------------------------------
def xavier_uniform(key, dim):
    # torch.nn.init.xavier_uniform_ with gain=1 on a (dim, dim) weight.
    bound = math.sqrt(6.0 / (2.0 * dim))
    return jax.random.uniform(key, (dim, dim), jnp.float32, -bound, bound)


def reference(q, k, v, mask, wq, wk, wv, wo, *, heads):
    # Pure-JAX reference mirroring the PyTorch forward.
    B, S, dim = q.shape
    depth = dim // heads
    norm = math.sqrt(depth)
    qp = (q @ wq).reshape(B, S, heads, depth).transpose(0, 2, 1, 3)   # (B,H,S,d)
    kp = (k @ wk).reshape(B, S, heads, depth).transpose(0, 2, 3, 1)   # (B,H,d,S)
    vp = (v @ wv).reshape(B, S, heads, depth).transpose(0, 2, 1, 3)   # (B,H,S,d)
    g = (qp @ kp) / norm - mask * 1e9
    a = jax.nn.softmax(g, axis=-1)
    att = (a @ vp).transpose(0, 2, 1, 3).reshape(B, S, dim)
    return att @ wo


if __name__ == "__main__":
    # Lane-dense sizes: S and dim multiples of 128.
    B, S, dim, heads = 2, 128, 128, 4

    root = jax.random.PRNGKey(0)
    kq, kk, kv, kwq, kwk, kwv, kwo, km = jax.random.split(root, 8)

    q = jax.random.normal(kq, (B, S, dim), jnp.float32)
    k = jax.random.normal(kk, (B, S, dim), jnp.float32)
    v = jax.random.normal(kv, (B, S, dim), jnp.float32)
    # Binary mask (1 = masked out), broadcast over heads.
    mask = (jax.random.uniform(km, (B, 1, S, S)) < 0.2).astype(jnp.float32)

    wq = xavier_uniform(kwq, dim)
    wk = xavier_uniform(kwk, dim)
    wv = xavier_uniform(kwv, dim)
    wo = xavier_uniform(kwo, dim)

    with jax.default_matmul_precision("highest"):
        ref = reference(q, k, v, mask, wq, wk, wv, wo, heads=heads)
        ref = jax.block_until_ready(ref)

    # 1) f32 compute path: must match the PyTorch-equivalent reference tightly.
    out_f32 = mh_attention(q, k, v, mask, wq, wk, wv, wo, heads=heads,
                           q_tile=64, compute_dtype=jnp.float32)
    out_f32 = jax.block_until_ready(out_f32)
    assert out_f32.shape == (B, S, dim)
    assert jnp.allclose(out_f32, ref, atol=5e-4, rtol=5e-4), "f32 mismatch vs reference"

    # 2) bf16 matmul operands (recommended TPU perf path), f32 accumulation.
    out_bf16 = mh_attention(q, k, v, mask, wq, wk, wv, wo, heads=heads,
                            q_tile=64, compute_dtype=jnp.bfloat16)
    out_bf16 = jax.block_until_ready(out_bf16)
    assert out_bf16.shape == (B, S, dim)
    assert jnp.allclose(out_bf16, ref, atol=5e-2, rtol=5e-2), "bf16 mismatch vs reference"

    print("KERNEL_OK")
</pallas_src>

<mosaic_0001>
module attributes {stable_mosaic.version = 11 : i64} {
  func.func @qkv_proj_kernel(%arg0: i32, %arg1: memref<256x128xf32, #tpu.memory_space<vmem>>, %arg2: memref<256x128xf32, #tpu.memory_space<vmem>>, %arg3: memref<256x128xf32, #tpu.memory_space<vmem>>, %arg4: memref<128x128xf32, #tpu.memory_space<vmem>>, %arg5: memref<128x128xf32, #tpu.memory_space<vmem>>, %arg6: memref<128x128xf32, #tpu.memory_space<vmem>>, %arg7: memref<256x128xf32, #tpu.memory_space<vmem>>, %arg8: memref<256x128xf32, #tpu.memory_space<vmem>>, %arg9: memref<256x128xf32, #tpu.memory_space<vmem>>) attributes {dimension_semantics = [#tpu.dimension_semantics<parallel>], iteration_bounds = array<i64: 1>, scalar_prefetch = 0 : i64, scratch_operands = 0 : i64, tpu.core_type = #tpu.core_type<tc>, window_params = [{transform_indices = @transform_0, window_bounds = array<i64: 256, 128>}, {transform_indices = @transform_1, window_bounds = array<i64: 256, 128>}, {transform_indices = @transform_2, window_bounds = array<i64: 256, 128>}, {pipeline_mode = #tpu.pipeline_mode<synchronous>, transform_indices = @transform_3, window_bounds = array<i64: 128, 128>}, {pipeline_mode = #tpu.pipeline_mode<synchronous>, transform_indices = @transform_4, window_bounds = array<i64: 128, 128>}, {pipeline_mode = #tpu.pipeline_mode<synchronous>, transform_indices = @transform_5, window_bounds = array<i64: 128, 128>}, {transform_indices = @transform_6, window_bounds = array<i64: 256, 128>}, {transform_indices = @transform_7, window_bounds = array<i64: 256, 128>}, {transform_indices = @transform_8, window_bounds = array<i64: 256, 128>}]} {
    %c0 = arith.constant 0 : index
    %c0_0 = arith.constant 0 : index
    %0 = vector.load %arg1[%c0, %c0_0] : memref<256x128xf32, #tpu.memory_space<vmem>>, vector<256x128xf32>
    %c0_1 = arith.constant 0 : index
    %c0_2 = arith.constant 0 : index
    %1 = vector.load %arg4[%c0_1, %c0_2] : memref<128x128xf32, #tpu.memory_space<vmem>>, vector<128x128xf32>
    %cst = arith.constant dense<0.000000e+00> : vector<256x128xf32>
    %2 = tpu.matmul %0, %1, %cst {dimension_numbers = #tpu.dot_dimension_numbers<[1], [0], [0], [1], [0, 0, 1, 1], [], []>} : vector<256x128xf32>, vector<128x128xf32>, vector<256x128xf32> -> vector<256x128xf32>
    %c0_3 = arith.constant 0 : index
    %c0_4 = arith.constant 0 : index
    %3 = vector.load %arg7[%c0_3, %c0_4] : memref<256x128xf32, #tpu.memory_space<vmem>>, vector<256x128xf32>
    tpu.vector_store %arg7[%c0_3, %c0_4], %2 {strides = array<i32>} : memref<256x128xf32, #tpu.memory_space<vmem>>, vector<256x128xf32>,
    %c0_5 = arith.constant 0 : index
    %c0_6 = arith.constant 0 : index
    %4 = vector.load %arg2[%c0_5, %c0_6] : memref<256x128xf32, #tpu.memory_space<vmem>>, vector<256x128xf32>
    %c0_7 = arith.constant 0 : index
    %c0_8 = arith.constant 0 : index
    %5 = vector.load %arg5[%c0_7, %c0_8] : memref<128x128xf32, #tpu.memory_space<vmem>>, vector<128x128xf32>
    %cst_9 = arith.constant dense<0.000000e+00> : vector<256x128xf32>
    %6 = tpu.matmul %4, %5, %cst_9 {dimension_numbers = #tpu.dot_dimension_numbers<[1], [0], [0], [1], [0, 0, 1, 1], [], []>} : vector<256x128xf32>, vector<128x128xf32>, vector<256x128xf32> -> vector<256x128xf32>
    %c0_10 = arith.constant 0 : index
    %c0_11 = arith.constant 0 : index
    %7 = vector.load %arg8[%c0_10, %c0_11] : memref<256x128xf32, #tpu.memory_space<vmem>>, vector<256x128xf32>
    tpu.vector_store %arg8[%c0_10, %c0_11], %6 {strides = array<i32>} : memref<256x128xf32, #tpu.memory_space<vmem>>, vector<256x128xf32>,
    %c0_12 = arith.constant 0 : index
    %c0_13 = arith.constant 0 : index
    %8 = vector.load %arg3[%c0_12, %c0_13] : memref<256x128xf32, #tpu.memory_space<vmem>>, vector<256x128xf32>
    %c0_14 = arith.constant 0 : index
    %c0_15 = arith.constant 0 : index
    %9 = vector.load %arg6[%c0_14, %c0_15] : memref<128x128xf32, #tpu.memory_space<vmem>>, vector<128x128xf32>
    %cst_16 = arith.constant dense<0.000000e+00> : vector<256x128xf32>
    %10 = tpu.matmul %8, %9, %cst_16 {dimension_numbers = #tpu.dot_dimension_numbers<[1], [0], [0], [1], [0, 0, 1, 1], [], []>} : vector<256x128xf32>, vector<128x128xf32>, vector<256x128xf32> -> vector<256x128xf32>
    %c0_17 = arith.constant 0 : index
    %c0_18 = arith.constant 0 : index
    %11 = vector.load %arg9[%c0_17, %c0_18] : memref<256x128xf32, #tpu.memory_space<vmem>>, vector<256x128xf32>
    tpu.vector_store %arg9[%c0_17, %c0_18], %10 {strides = array<i32>} : memref<256x128xf32, #tpu.memory_space<vmem>>, vector<256x128xf32>,
    return
  }
  func.func @transform_0(%arg0: i32) -> (i32, i32) {
    %c0_i32 = arith.constant 0 : i32
    %c0_i32_0 = arith.constant 0 : i32
    return %arg0, %c0_i32 : i32, i32
  }
  func.func @transform_1(%arg0: i32) -> (i32, i32) {
    %c0_i32 = arith.constant 0 : i32
    %c0_i32_0 = arith.constant 0 : i32
    return %arg0, %c0_i32 : i32, i32
  }
  func.func @transform_2(%arg0: i32) -> (i32, i32) {
    %c0_i32 = arith.constant 0 : i32
    %c0_i32_0 = arith.constant 0 : i32
    return %arg0, %c0_i32 : i32, i32
  }
  func.func @transform_3(%arg0: i32) -> (i32, i32) {
    %c0_i32 = arith.constant 0 : i32
    %c0_i32_0 = arith.constant 0 : i32
    %c0_i32_1 = arith.constant 0 : i32
    return %c0_i32, %c0_i32_0 : i32, i32
  }
  func.func @transform_4(%arg0: i32) -> (i32, i32) {
    %c0_i32 = arith.constant 0 : i32
    %c0_i32_0 = arith.constant 0 : i32
    %c0_i32_1 = arith.constant 0 : i32
    return %c0_i32, %c0_i32_0 : i32, i32
  }
  func.func @transform_5(%arg0: i32) -> (i32, i32) {
    %c0_i32 = arith.constant 0 : i32
    %c0_i32_0 = arith.constant 0 : i32
    %c0_i32_1 = arith.constant 0 : i32
    return %c0_i32, %c0_i32_0 : i32, i32
  }
  func.func @transform_6(%arg0: i32) -> (i32, i32) {
    %c0_i32 = arith.constant 0 : i32
    %c0_i32_0 = arith.constant 0 : i32
    return %arg0, %c0_i32 : i32, i32
  }
  func.func @transform_7(%arg0: i32) -> (i32, i32) {
    %c0_i32 = arith.constant 0 : i32
    %c0_i32_0 = arith.constant 0 : i32
    return %arg0, %c0_i32 : i32, i32
  }
  func.func @transform_8(%arg0: i32) -> (i32, i32) {
    %c0_i32 = arith.constant 0 : i32
    %c0_i32_0 = arith.constant 0 : i32
    return %arg0, %c0_i32 : i32, i32
  }
}

module attributes {stable_mosaic.version = 11 : i64} {
  func.func @qkv_proj_kernel(%arg0: i32, %arg1: memref<256x128xf32, #tpu.memory_space<vmem>>, %arg2: memref<256x128xf32, #tpu.memory_space<vmem>>, %arg3: memref<256x128xf32, #tpu.memory_space<vmem>>, %arg4: memref<128x128xf32, #tpu.memory_space<vmem>>, %arg5: memref<128x128xf32, #tpu.memory_space<vmem>>, %arg6: memref<128x128xf32, #tpu.memory_space<vmem>>, %arg7: memref<256x128xf32, #tpu.memory_space<vmem>>, %arg8: memref<256x128xf32, #tpu.memory_space<vmem>>, %arg9: memref<256x128xf32, #tpu.memory_space<vmem>>) attributes {dimension_semantics = [#tpu.dimension_semantics<parallel>], iteration_bounds = array<i64: 1>, scalar_prefetch = 0 : i64, scratch_operands = 0 : i64, tpu.core_type = #tpu.core_type<tc>, window_params = [{transform_indices = @transform_0, window_bounds = array<i64: 256, 128>}, {transform_indices = @transform_1, window_bounds = array<i64: 256, 128>}, {transform_indices = @transform_2, window_bounds = array<i64: 256, 128>}, {pipeline_mode = #tpu.pipeline_mode<synchronous>, transform_indices = @transform_3, window_bounds = array<i64: 128, 128>}, {pipeline_mode = #tpu.pipeline_mode<synchronous>, transform_indices = @transform_4, window_bounds = array<i64: 128, 128>}, {pipeline_mode = #tpu.pipeline_mode<synchronous>, transform_indices = @transform_5, window_bounds = array<i64: 128, 128>}, {transform_indices = @transform_6, window_bounds = array<i64: 256, 128>}, {transform_indices = @transform_7, window_bounds = array<i64: 256, 128>}, {transform_indices = @transform_8, window_bounds = array<i64: 256, 128>}]} {
    %c0 = arith.constant 0 : index
    %c0_0 = arith.constant 0 : index
    %0 = vector.load %arg1[%c0, %c0_0] : memref<256x128xf32, #tpu.memory_space<vmem>>, vector<256x128xf32>
    %c0_1 = arith.constant 0 : index
    %c0_2 = arith.constant 0 : index
    %1 = vector.load %arg4[%c0_1, %c0_2] : memref<128x128xf32, #tpu.memory_space<vmem>>, vector<128x128xf32>
    %cst = arith.constant dense<0.000000e+00> : vector<256x128xf32>
    %2 = tpu.matmul %0, %1, %cst {dimension_numbers = #tpu.dot_dimension_numbers<[1], [0], [0], [1], [0, 0, 1, 1], [], []>} : vector<256x128xf32>, vector<128x128xf32>, vector<256x128xf32> -> vector<256x128xf32>
    %c0_3 = arith.constant 0 : index
    %c0_4 = arith.constant 0 : index
    %3 = vector.load %arg7[%c0_3, %c0_4] : memref<256x128xf32, #tpu.memory_space<vmem>>, vector<256x128xf32>
    tpu.vector_store %arg7[%c0_3, %c0_4], %2 {strides = array<i32>} : memref<256x128xf32, #tpu.memory_space<vmem>>, vector<256x128xf32>,
    %c0_5 = arith.constant 0 : index
    %c0_6 = arith.constant 0 : index
    %4 = vector.load %arg2[%c0_5, %c0_6] : memref<256x128xf32, #tpu.memory_space<vmem>>, vector<256x128xf32>
    %c0_7 = arith.constant 0 : index
    %c0_8 = arith.constant 0 : index
    %5 = vector.load %arg5[%c0_7, %c0_8] : memref<128x128xf32, #tpu.memory_space<vmem>>, vector<128x128xf32>
    %cst_9 = arith.constant dense<0.000000e+00> : vector<256x128xf32>
    %6 = tpu.matmul %4, %5, %cst_9 {dimension_numbers = #tpu.dot_dimension_numbers<[1], [0], [0], [1], [0, 0, 1, 1], [], []>} : vector<256x128xf32>, vector<128x128xf32>, vector<256x128xf32> -> vector<256x128xf32>
    %c0_10 = arith.constant 0 : index
    %c0_11 = arith.constant 0 : index
    %7 = vector.load %arg8[%c0_10, %c0_11] : memref<256x128xf32, #tpu.memory_space<vmem>>, vector<256x128xf32>
    tpu.vector_store %arg8[%c0_10, %c0_11], %6 {strides = array<i32>} : memref<256x128xf32, #tpu.memory_space<vmem>>, vector<256x128xf32>,
    %c0_12 = arith.constant 0 : index
    %c0_13 = arith.constant 0 : index
    %8 = vector.load %arg3[%c0_12, %c0_13] : memref<256x128xf32, #tpu.memory_space<vmem>>, vector<256x128xf32>
    %c0_14 = arith.constant 0 : index
    %c0_15 = arith.constant 0 : index
    %9 = vector.load %arg6[%c0_14, %c0_15] : memref<128x128xf32, #tpu.memory_space<vmem>>, vector<128x128xf32>
    %cst_16 = arith.constant dense<0.000000e+00> : vector<256x128xf32>
    %10 = tpu.matmul %8, %9, %cst_16 {dimension_numbers = #tpu.dot_dimension_numbers<[1], [0], [0], [1], [0, 0, 1, 1], [], []>} : vector<256x128xf32>, vector<128x128xf32>, vector<256x128xf32> -> vector<256x128xf32>
    %c0_17 = arith.constant 0 : index
    %c0_18 = arith.constant 0 : index
    %11 = vector.load %arg9[%c0_17, %c0_18] : memref<256x128xf32, #tpu.memory_space<vmem>>, vector<256x128xf32>
    tpu.vector_store %arg9[%c0_17, %c0_18], %10 {strides = array<i32>} : memref<256x128xf32, #tpu.memory_space<vmem>>, vector<256x128xf32>,
    return
  }
  func.func @transform_0(%arg0: i32) -> (i32, i32) {
    %c0_i32 = arith.constant 0 : i32
    %c0_i32_0 = arith.constant 0 : i32
    return %arg0, %c0_i32 : i32, i32
  }
  func.func @transform_1(%arg0: i32) -> (i32, i32) {
    %c0_i32 = arith.constant 0 : i32
    %c0_i32_0 = arith.constant 0 : i32
    return %arg0, %c0_i32 : i32, i32
  }
  func.func @transform_2(%arg0: i32) -> (i32, i32) {
    %c0_i32 = arith.constant 0 : i32
    %c0_i32_0 = arith.constant 0 : i32
    return %arg0, %c0_i32 : i32, i32
  }
  func.func @transform_3(%arg0: i32) -> (i32, i32) {
    %c0_i32 = arith.constant 0 : i32
    %c0_i32_0 = arith.constant 0 : i32
    %c0_i32_1 = arith.constant 0 : i32
    return %c0_i32, %c0_i32_0 : i32, i32
  }
  func.func @transform_4(%arg0: i32) -> (i32, i32) {
    %c0_i32 = arith.constant 0 : i32
    %c0_i32_0 = arith.constant 0 : i32
    %c0_i32_1 = arith.constant 0 : i32
    return %c0_i32, %c0_i32_0 : i32, i32
  }
  func.func @transform_5(%arg0: i32) -> (i32, i32) {
    %c0_i32 = arith.constant 0 : i32
    %c0_i32_0 = arith.constant 0 : i32
    %c0_i32_1 = arith.constant 0 : i32
    return %c0_i32, %c0_i32_0 : i32, i32
  }
  func.func @transform_6(%arg0: i32) -> (i32, i32) {
    %c0_i32 = arith.constant 0 : i32
    %c0_i32_0 = arith.constant 0 : i32
    return %arg0, %c0_i32 : i32, i32
  }
  func.func @transform_7(%arg0: i32) -> (i32, i32) {
    %c0_i32 = arith.constant 0 : i32
    %c0_i32_0 = arith.constant 0 : i32
    return %arg0, %c0_i32 : i32, i32
  }
  func.func @transform_8(%arg0: i32) -> (i32, i32) {
    %c0_i32 = arith.constant 0 : i32
    %c0_i32_0 = arith.constant 0 : i32
    return %arg0, %c0_i32 : i32, i32
  }
}

</mosaic_0001>

<llo_original>
// kernel: tpu_custom_call.1
$region0: #{tpu_custom_call.1}
  #allocation0 [shape = 'u32[]', space=smem, size = 0x4, offset = 0x4, fixed_abs, tag = 'smem constant byte address 0x4 - core index']
  #allocation1 [shape = 'u32[144,128]{1,0:T(1,128)}', space=vmem, size = 0x12000, scoped, tag = 'internal scratch']
  %s0 = inlined_call_operand.hbm [shape: f32[256,128], index: 0, kind: input, shape index: {}]
  %s1 = inlined_call_operand.hbm [shape: f32[256,128], index: 1, kind: input, shape index: {}]
  %s2 = inlined_call_operand.hbm [shape: f32[256,128], index: 2, kind: input, shape index: {}]
  %s3 = inlined_call_operand.hbm [shape: f32[128,128], index: 3, kind: input, shape index: {}]
  %s4 = inlined_call_operand.hbm [shape: f32[128,128], index: 4, kind: input, shape index: {}]
  %s5 = inlined_call_operand.hbm [shape: f32[128,128], index: 5, kind: input, shape index: {}]
  %s6 = inlined_call_operand.hbm [shape: f32[256,128], index: 6, kind: output, shape index: {0}]
  %s7 = inlined_call_operand.hbm [shape: f32[256,128], index: 7, kind: output, shape index: {1}]
  %s8 = inlined_call_operand.hbm [shape: f32[256,128], index: 8, kind: output, shape index: {2}]
  %9 = xla_tuple %s6, %s7, %s8
  %s10 = sld [smem:[#allocation0]]
  $region74: #{tpu_custom_call.1} parent=0
    _
  %s12 = ssub.s32 1, %s10
  %s13 = scalar_select 0, %s12, %s10
  $region1: #{tpu_custom_call.1} parent=0
    #allocation2 [shape = 'u8[131072]{0}', space=vmem, size = 0x20000, scoped, tag = 'input window, operand 0, single buffered']
    #allocation3 [shape = 's32[1]{0}', space=sflag, size = 0x4, scoped, tag = 'scoped memory for tpu_custom_call.1']
    #allocation4 [shape = 's32[1]{0}', space=sflag, size = 0x4, scoped, tag = 'scoped memory for tpu_custom_call.1']
    #allocation5 [shape = 'u8[131072]{0}', space=vmem, size = 0x20000, scoped, tag = 'input window, operand 1, single buffered']
    #allocation6 [shape = 's32[1]{0}', space=sflag, size = 0x4, scoped, tag = 'scoped memory for tpu_custom_call.1']
    #allocation7 [shape = 'u8[131072]{0}', space=vmem, size = 0x20000, scoped, tag = 'input window, operand 2, single buffered']
    #allocation8 [shape = 'u8[65536]{0}', space=vmem, size = 0x10000, scoped, tag = 'input window, operand 3, single buffered']
    #allocation9 [shape = 's32[1]{0}', space=sflag, size = 0x4, scoped, tag = 'scoped memory for tpu_custom_call.1']
    #allocation10 [shape = 'u8[65536]{0}', space=vmem, size = 0x10000, scoped, tag = 'input window, operand 4, single buffered']
    #allocation11 [shape = 'u8[65536]{0}', space=vmem, size = 0x10000, scoped, tag = 'input window, operand 5, single buffered']
    #allocation12 [shape = 's32[1]{0}', space=sflag, size = 0x4, scoped, tag = 'scoped memory for tpu_custom_call.1']
    #allocation13 [shape = 'u8[131072]{0}', space=vmem, size = 0x20000, scoped, tag = 'output window, operand 0, single buffered']
    #allocation14 [shape = 'u8[131072]{0}', space=vmem, size = 0x20000, scoped, tag = 'output window, operand 1, single buffered']
    #allocation15 [shape = 's32[1]{0}', space=sflag, size = 0x4, scoped, tag = 'scoped memory for tpu_custom_call.1']
    #allocation16 [shape = 'u8[131072]{0}', space=vmem, size = 0x20000, scoped, tag = 'output window, operand 2, single buffered']
    %14 = vsyncpa [#allocation3], 0
    %15 = vsyncpa [#allocation6], 0
    %16 = vsyncpa [#allocation9], 0
    %17 = vsyncpa [#allocation12], 0
    %18 = vsyncpa [#allocation4], 0
    %19 = vsyncpa [#allocation15], 0
    // Predicated region
    $region2: #{tpu_custom_call.1} parent=1 // pred_check
      _
    $region3: #{tpu_custom_call.1} parent=1 // pred_check_branch
      %21 = sbr.rel (0) target = $region5
    $region4: #{tpu_custom_call.1} parent=1 // pred_region
      %s23 = ssub.s32 4096, 4096
      %24 = vsyncadd [#allocation3], %s23
      %s25 = sshll.u32 [#allocation2], 4
      %s26 = int_to_ptr.vmem [resolvable:$true] %s25
      %31 = dma.hbm_to_vmem [thread:$0]  %s0, 4096, %s26, [#allocation3], 128, 128, 8
    $region5: #{tpu_custom_call.1} parent=1 // pred_fallthru
      _
    // Predicated region
    $region6: #{tpu_custom_call.1} parent=1 // pred_check
      _
    $region7: #{tpu_custom_call.1} parent=1 // pred_check_branch
      %33 = sbr.rel (0) target = $region9
    $region8: #{tpu_custom_call.1} parent=1 // pred_region
      %s35 = ssub.s32 4096, 4096
      %36 = vsyncadd [#allocation6], %s35
      %s37 = sshll.u32 [#allocation5], 4
      %s38 = int_to_ptr.vmem [resolvable:$true] %s37
      %43 = dma.hbm_to_vmem [thread:$0]  %s1, 4096, %s38, [#allocation6], 128, 128, 8
    $region9: #{tpu_custom_call.1} parent=1 // pred_fallthru
      _
    // Predicated region
    $region10: #{tpu_custom_call.1} parent=1 // pred_check
      _
    $region11: #{tpu_custom_call.1} parent=1 // pred_check_branch
      %45 = sbr.rel (0) target = $region13
    $region12: #{tpu_custom_call.1} parent=1 // pred_region
      %s47 = ssub.s32 4096, 4096
      %48 = vsyncadd [#allocation6], %s47
      %s49 = sshll.u32 [#allocation7], 4
      %s50 = int_to_ptr.vmem [resolvable:$true] %s49
      %55 = dma.hbm_to_vmem [thread:$0]  %s2, 4096, %s50, [#allocation6], 128, 128, 8
    $region13: #{tpu_custom_call.1} parent=1 // pred_fallthru
      _
    // Predicated region
    $region14: #{tpu_custom_call.1} parent=1 // pred_check
      _
    $region15: #{tpu_custom_call.1} parent=1 // pred_check_branch
      %57 = sbr.rel (0) target = $region17
    $region16: #{tpu_custom_call.1} parent=1 // pred_region
      %s59 = ssub.s32 2048, 2048
      %60 = vsyncadd [#allocation9], %s59
      %s61 = sshll.u32 [#allocation8], 4
      %s62 = int_to_ptr.vmem [resolvable:$true] %s61
      %67 = dma.hbm_to_vmem [thread:$0]  %s3, 2048, %s62, [#allocation9], 128, 128, 8
    $region17: #{tpu_custom_call.1} parent=1 // pred_fallthru
      _
    // Predicated region
    $region18: #{tpu_custom_call.1} parent=1 // pred_check
      _
    $region19: #{tpu_custom_call.1} parent=1 // pred_check_branch
      %69 = sbr.rel (0) target = $region21
    $region20: #{tpu_custom_call.1} parent=1 // pred_region
      %s71 = ssub.s32 2048, 2048
      %72 = vsyncadd [#allocation9], %s71
      %s73 = sshll.u32 [#allocation10], 4
      %s74 = int_to_ptr.vmem [resolvable:$true] %s73
      %79 = dma.hbm_to_vmem [thread:$0]  %s4, 2048, %s74, [#allocation9], 128, 128, 8
    $region21: #{tpu_custom_call.1} parent=1 // pred_fallthru
      _
    // Predicated region
    $region22: #{tpu_custom_call.1} parent=1 // pred_check
      _
    $region23: #{tpu_custom_call.1} parent=1 // pred_check_branch
      %81 = sbr.rel (0) target = $region25
    $region24: #{tpu_custom_call.1} parent=1 // pred_region
      %s83 = ssub.s32 2048, 2048
      %84 = vsyncadd [#allocation12], %s83
      %s85 = sshll.u32 [#allocation11], 4
      %s86 = int_to_ptr.vmem [resolvable:$true] %s85
      %91 = dma.hbm_to_vmem [thread:$0]  %s5, 2048, %s86, [#allocation12], 128, 128, 8
    $region25: #{tpu_custom_call.1} parent=1 // pred_fallthru
      _
    // Predicated region
    $region26: #{tpu_custom_call.1} parent=1 // pred_check
      _
    $region27: #{tpu_custom_call.1} parent=1 // pred_check_branch
      %93 = sbr.rel (0) target = $region29
    $region28: #{tpu_custom_call.1} parent=1 // pred_region
      %94 = dma.done [#allocation3], 4096
    $region29: #{tpu_custom_call.1} parent=1 // pred_fallthru
      _
    // Predicated region
    $region30: #{tpu_custom_call.1} parent=1 // pred_check
      _
    $region31: #{tpu_custom_call.1} parent=1 // pred_check_branch
      %96 = sbr.rel (0) target = $region33
    $region32: #{tpu_custom_call.1} parent=1 // pred_region
      %97 = dma.done [#allocation6], 4096
    $region33: #{tpu_custom_call.1} parent=1 // pred_fallthru
      _
    // Predicated region
    $region34: #{tpu_custom_call.1} parent=1 // pred_check
      _
    $region35: #{tpu_custom_call.1} parent=1 // pred_check_branch
      %99 = sbr.rel (0) target = $region37
    $region36: #{tpu_custom_call.1} parent=1 // pred_region
      %100 = dma.done [#allocation6], 4096
    $region37: #{tpu_custom_call.1} parent=1 // pred_fallthru
      _
    // Predicated region
    $region38: #{tpu_custom_call.1} parent=1 // pred_check
      _
    $region39: #{tpu_custom_call.1} parent=1 // pred_check_branch
      %102 = sbr.rel (0) target = $region41
    $region40: #{tpu_custom_call.1} parent=1 // pred_region
      %103 = dma.done [#allocation9], 2048
    $region41: #{tpu_custom_call.1} parent=1 // pred_fallthru
      _
    // Predicated region
    $region42: #{tpu_custom_call.1} parent=1 // pred_check
      _
    $region43: #{tpu_custom_call.1} parent=1 // pred_check_branch
      %105 = sbr.rel (0) target = $region45
    $region44: #{tpu_custom_call.1} parent=1 // pred_region
      %106 = dma.done [#allocation9], 2048
    $region45: #{tpu_custom_call.1} parent=1 // pred_fallthru
      _
    // Predicated region
    $region46: #{tpu_custom_call.1} parent=1 // pred_check
      _
    $region47: #{tpu_custom_call.1} parent=1 // pred_check_branch
      %108 = sbr.rel (0) target = $region49
    $region48: #{tpu_custom_call.1} parent=1 // pred_region
      %109 = dma.done [#allocation12], 2048
    $region49: #{tpu_custom_call.1} parent=1 // pred_fallthru
      _
    %v110 = vld [vmem:[#allocation2] sm:$0xff]
    %v111 = vld [vmem:[#allocation2 + $0x8] sm:$0xff]
    %v112 = vld [vmem:[#allocation2 + $0x10] sm:$0xff]
    %v113 = vld [vmem:[#allocation2 + $0x18] sm:$0xff]
    %v114 = vld [vmem:[#allocation2 + $0x20] sm:$0xff]
    %v115 = vld [vmem:[#allocation2 + $0x28] sm:$0xff]
    %v116 = vld [vmem:[#allocation2 + $0x30] sm:$0xff]
    %v117 = vld [vmem:[#allocation2 + $0x38] sm:$0xff]
    %v118 = vld [vmem:[#allocation2 + $0x40] sm:$0xff]
    %v119 = vld [vmem:[#allocation2 + $0x48] sm:$0xff]
    %v120 = vld [vmem:[#allocation2 + $0x50] sm:$0xff]
    %v121 = vld [vmem:[#allocation2 + $0x58] sm:$0xff]
    %v122 = vld [vmem:[#allocation2 + $0x60] sm:$0xff]
    %v123 = vld [vmem:[#allocation2 + $0x68] sm:$0xff]
    %v124 = vld [vmem:[#allocation2 + $0x70] sm:$0xff]
    %v125 = vld [vmem:[#allocation2 + $0x78] sm:$0xff]
    %v126 = vld [vmem:[#allocation2 + $0x80] sm:$0xff]
    %v127 = vld [vmem:[#allocation2 + $0x88] sm:$0xff]
    %v128 = vld [vmem:[#allocation2 + $0x90] sm:$0xff]
    %v129 = vld [vmem:[#allocation2 + $0x98] sm:$0xff]
    %v130 = vld [vmem:[#allocation2 + $0xa0] sm:$0xff]
    %v131 = vld [vmem:[#allocation2 + $0xa8] sm:$0xff]
    %v132 = vld [vmem:[#allocation2 + $0xb0] sm:$0xff]
    %v133 = vld [vmem:[#allocation2 + $0xb8] sm:$0xff]
    %v134 = vld [vmem:[#allocation2 + $0xc0] sm:$0xff]
    %v135 = vld [vmem:[#allocation2 + $0xc8] sm:$0xff]
    %v136 = vld [vmem:[#allocation2 + $0xd0] sm:$0xff]
    %v137 = vld [vmem:[#allocation2 + $0xd8] sm:$0xff]
    %v138 = vld [vmem:[#allocation2 + $0xe0] sm:$0xff]
    %v139 = vld [vmem:[#allocation2 + $0xe8] sm:$0xff]
    %v140 = vld [vmem:[#allocation2 + $0xf0] sm:$0xff]
    %v141 = vld [vmem:[#allocation2 + $0xf8] sm:$0xff]
    %v142 = vld [vmem:[#allocation8] sm:$0xff]
    %v143 = vld [vmem:[#allocation8 + $0x8] sm:$0xff]
    %v144 = vld [vmem:[#allocation8 + $0x10] sm:$0xff]
    %v145 = vld [vmem:[#allocation8 + $0x18] sm:$0xff]
    %v146 = vld [vmem:[#allocation8 + $0x20] sm:$0xff]
    %v147 = vld [vmem:[#allocation8 + $0x28] sm:$0xff]
    %v148 = vld [vmem:[#allocation8 + $0x30] sm:$0xff]
    %v149 = vld [vmem:[#allocation8 + $0x38] sm:$0xff]
    %v150 = vld [vmem:[#allocation8 + $0x40] sm:$0xff]
    %v151 = vld [vmem:[#allocation8 + $0x48] sm:$0xff]
    %v152 = vld [vmem:[#allocation8 + $0x50] sm:$0xff]
    %v153 = vld [vmem:[#allocation8 + $0x58] sm:$0xff]
    %v154 = vld [vmem:[#allocation8 + $0x60] sm:$0xff]
    %v155 = vld [vmem:[#allocation8 + $0x68] sm:$0xff]
    %v156 = vld [vmem:[#allocation8 + $0x70] sm:$0xff]
    %v157 = vld [vmem:[#allocation8 + $0x78] sm:$0xff]
    %158 = vmatprep.subr.mxu0 0.0
    %159 = vmatpush1.msra.mxu0 %v142
    %160 = vmatprep.subr.mxu0 0.0
    %161 = vmatpush1.msra.mxu0 %v143
    %162 = vmatprep.subr.mxu0 0.0
    %163 = vmatpush1.msra.mxu0 %v144
    %164 = vmatprep.subr.mxu0 0.0
    %165 = vmatpush1.msra.mxu0 %v145
    %166 = vmatprep.subr.mxu0 0.0
    %167 = vmatpush1.msra.mxu0 %v146
    %168 = vmatprep.subr.mxu0 0.0
    %169 = vmatpush1.msra.mxu0 %v147
    %170 = vmatprep.subr.mxu0 0.0
    %171 = vmatpush1.msra.mxu0 %v148
    %172 = vmatprep.subr.mxu0 0.0
    %173 = vmatpush1.msra.mxu0 %v149
    %174 = vmatprep.subr.mxu0 0.0
    %175 = vmatpush1.msra.mxu0 %v150
    %176 = vmatprep.subr.mxu0 0.0
    %177 = vmatpush1.msra.mxu0 %v151
    %178 = vmatprep.subr.mxu0 0.0
    %179 = vmatpush1.msra.mxu0 %v152
    %180 = vmatprep.subr.mxu0 0.0
    %181 = vmatpush1.msra.mxu0 %v153
    %182 = vmatprep.subr.mxu0 0.0
    %183 = vmatpush1.msra.mxu0 %v154
    %184 = vmatprep.subr.mxu0 0.0
    %185 = vmatpush1.msra.mxu0 %v155
    %186 = vmatprep.subr.mxu0 0.0
    %187 = vmatpush1.msra.mxu0 %v156
    %188 = vmatprep.subr.mxu0 0.0
    %189 = vmatpush1.msra.mxu0 %v157
    %190 = vmatprep.subr.mxu0 0.0
    %191 = vmatpush1.msra.mxu0 0.0
    %192 = vmatprep.subr.mxu0 0.0
    %193 = vmatpush1.msra.mxu0 0.0
    %194 = vmatprep.subr.mxu0 0.0
    %195 = vmatpush1.msra.mxu0 0.0
    %196 = vmatprep.subr.mxu0 0.0
    %197 = vmatpush1.msra.mxu0 0.0
    %198 = vmatprep.subr.mxu0 0.0
    %199 = vmatpush1.msra.mxu0 0.0
    %200 = vmatprep.subr.mxu0 0.0
    %201 = vmatpush1.msra.mxu0 0.0
    %202 = vmatprep.subr.mxu0 0.0
    %203 = vmatpush1.msra.mxu0 0.0
    %204 = vmatprep.subr.mxu0 0.0
    %205 = vmatpush1.msra.mxu0 0.0
    %206 = vmatprep.subr.mxu0 0.0
    %207 = vmatpush1.msra.mxu0 0.0
    %208 = vmatprep.subr.mxu0 0.0
    %209 = vmatpush1.msra.mxu0 0.0
    %210 = vmatprep.subr.mxu0 0.0
    %211 = vmatpush1.msra.mxu0 0.0
    %212 = vmatprep.subr.mxu0 0.0
    %213 = vmatpush1.msra.mxu0 0.0
    %214 = vmatprep.subr.mxu0 0.0
    %215 = vmatpush1.msra.mxu0 0.0
    %216 = vmatprep.subr.mxu0 0.0
    %217 = vmatpush1.msra.mxu0 0.0
    %218 = vmatprep.subr.mxu0 0.0
    %219 = vmatpush1.msra.mxu0 0.0
    %220 = vmatprep.subr.mxu0 0.0
    %221 = vmatpush1.msra.mxu0 0.0
    %222 = vmatprep.mubr.f32.mxu0 0.0
    %223 = vmatmul.mubr.f32.gmra.mrb[0].mxu0 %v110
    %v224 = vpop.f32.mrb[0].mxu0
    %v225 = vadd.f32 0.0, %v224
    %v226 = vpop.f32.mrb[0].mxu0
    %227 = vmatprep.mubr.f32.mxu0 0.0
    %228 = vmatmul.mubr.f32.gmra.mrb[0].mxu0 %v111
    %v229 = vpop.f32.mrb[0].mxu0
    %v230 = vadd.f32 0.0, %v229
    %v231 = vpop.f32.mrb[0].mxu0
    %232 = vmatprep.mubr.f32.mxu0 0.0
    %233 = vmatmul.mubr.f32.gmra.mrb[0].mxu0 %v112
    %v234 = vpop.f32.mrb[0].mxu0
    %v235 = vadd.f32 0.0, %v234
    %v236 = vpop.f32.mrb[0].mxu0
    %237 = vmatprep.mubr.f32.mxu0 0.0
    %238 = vmatmul.mubr.f32.gmra.mrb[0].mxu0 %v113
    %v239 = vpop.f32.mrb[0].mxu0
    %v240 = vadd.f32 0.0, %v239
    %v241 = vpop.f32.mrb[0].mxu0
    %242 = vmatprep.mubr.f32.mxu0 0.0
    %243 = vmatmul.mubr.f32.gmra.mrb[0].mxu0 %v114
    %v244 = vpop.f32.mrb[0].mxu0
    %v245 = vadd.f32 0.0, %v244
    %v246 = vpop.f32.mrb[0].mxu0
    %247 = vmatprep.mubr.f32.mxu0 0.0
    %248 = vmatmul.mubr.f32.gmra.mrb[0].mxu0 %v115
    %v249 = vpop.f32.mrb[0].mxu0
    %v250 = vadd.f32 0.0, %v249
    %v251 = vpop.f32.mrb[0].mxu0
    %252 = vmatprep.mubr.f32.mxu0 0.0
    %253 = vmatmul.mubr.f32.gmra.mrb[0].mxu0 %v116
    %v254 = vpop.f32.mrb[0].mxu0
    %v255 = vadd.f32 0.0, %v254
    %v256 = vpop.f32.mrb[0].mxu0
    %257 = vmatprep.mubr.f32.mxu0 0.0
    %258 = vmatmul.mubr.f32.gmra.mrb[0].mxu0 %v117
    %v259 = vpop.f32.mrb[0].mxu0
    %v260 = vadd.f32 0.0, %v259
    %v261 = vpop.f32.mrb[0].mxu0
    %262 = vmatprep.mubr.f32.mxu0 0.0
    %263 = vmatmul.mubr.f32.gmra.mrb[0].mxu0 %v118
    %v264 = vpop.f32.mrb[0].mxu0
    %v265 = vadd.f32 0.0, %v264
    %v266 = vpop.f32.mrb[0].mxu0
    %267 = vmatprep.mubr.f32.mxu0 0.0
    %268 = vmatmul.mubr.f32.gmra.mrb[0].mxu0 %v119
    %v269 = vpop.f32.mrb[0].mxu0
    %v270 = vadd.f32 0.0, %v269
    %v271 = vpop.f32.mrb[0].mxu0
    %272 = vmatprep.mubr.f32.mxu0 0.0
    %273 = vmatmul.mubr.f32.gmra.mrb[0].mxu0 %v120
    %v274 = vpop.f32.mrb[0].mxu0
    %v275 = vadd.f32 0.0, %v274
    %v276 = vpop.f32.mrb[0].mxu0
    %277 = vmatprep.mubr.f32.mxu0 0.0
    %278 = vmatmul.mubr.f32.gmra.mrb[0].mxu0 %v121
    %v279 = vpop.f32.mrb[0].mxu0
    %v280 = vadd.f32 0.0, %v279
    %v281 = vpop.f32.mrb[0].mxu0
    %282 = vmatprep.mubr.f32.mxu0 0.0
    %283 = vmatmul.mubr.f32.gmra.mrb[0].mxu0 %v122
    %v284 = vpop.f32.mrb[0].mxu0
    %v285 = vadd.f32 0.0, %v284
    %v286 = vpop.f32.mrb[0].mxu0
    %287 = vmatprep.mubr.f32.mxu0 0.0
    %288 = vmatmul.mubr.f32.gmra.mrb[0].mxu0 %v123
    %v289 = vpop.f32.mrb[0].mxu0
    %v290 = vadd.f32 0.0, %v289
    %v291 = vpop.f32.mrb[0].mxu0
    %292 = vmatprep.mubr.f32.mxu0 0.0
    %293 = vmatmul.mubr.f32.gmra.mrb[0].mxu0 %v124
    %v294 = vpop.f32.mrb[0].mxu0
    %v295 = vadd.f32 0.0, %v294
    %v296 = vpop.f32.mrb[0].mxu0
    %297 = vmatprep.mubr.f32.mxu0 0.0
    %298 = vmatmul.mubr.f32.gmra.mrb[0].mxu0 %v125
    %v299 = vpop.f32.mrb[0].mxu0
    %v300 = vadd.f32 0.0, %v299
    %v301 = vpop.f32.mrb[0].mxu0
    %302 = vmatprep.mubr.f32.mxu0 0.0
    %303 = vmatmul.mubr.f32.gmra.mrb[0].mxu0 %v126
    %v304 = vpop.f32.mrb[0].mxu0
    %v305 = vadd.f32 0.0, %v304
    %v306 = vpop.f32.mrb[0].mxu0
    %307 = vmatprep.mubr.f32.mxu0 0.0
    %308 = vmatmul.mubr.f32.gmra.mrb[0].mxu0 %v127
    %v309 = vpop.f32.mrb[0].mxu0
    %v310 = vadd.f32 0.0, %v309
    %v311 = vpop.f32.mrb[0].mxu0
    %312 = vmatprep.mubr.f32.mxu0 0.0
    %313 = vmatmul.mubr.f32.gmra.mrb[0].mxu0 %v128
    %v314 = vpop.f32.mrb[0].mxu0
    %v315 = vadd.f32 0.0, %v314
    %v316 = vpop.f32.mrb[0].mxu0
    %317 = vmatprep.mubr.f32.mxu0 0.0
    %318 = vmatmul.mubr.f32.gmra.mrb[0].mxu0 %v129
    %v319 = vpop.f32.mrb[0].mxu0
    %v320 = vadd.f32 0.0, %v319
    %v321 = vpop.f32.mrb[0].mxu0
    %322 = vmatprep.mubr.f32.mxu0 0.0
    %323 = vmatmul.mubr.f32.gmra.mrb[0].mxu0 %v130
    %v324 = vpop.f32.mrb[0].mxu0
    %v325 = vadd.f32 0.0, %v324
    %v326 = vpop.f32.mrb[0].mxu0
    %327 = vmatprep.mubr.f32.mxu0 0.0
    %328 = vmatmul.mubr.f32.gmra.mrb[0].mxu0 %v131
    %v329 = vpop.f32.mrb[0].mxu0
    %v330 = vadd.f32 0.0, %v329
    %v331 = vpop.f32.mrb[0].mxu0
    %332 = vmatprep.mubr.f32.mxu0 0.0
    %333 = vmatmul.mubr.f32.gmra.mrb[0].mxu0 %v132
    %v334 = vpop.f32.mrb[0].mxu0
    %v335 = vadd.f32 0.0, %v334
    %v336 = vpop.f32.mrb[0].mxu0
    %337 = vmatprep.mubr.f32.mxu0 0.0
    %338 = vmatmul.mubr.f32.gmra.mrb[0].mxu0 %v133
    %v339 = vpop.f32.mrb[0].mxu0
    %v340 = vadd.f32 0.0, %v339
    %v341 = vpop.f32.mrb[0].mxu0
    %342 = vmatprep.mubr.f32.mxu0 0.0
    %343 = vmatmul.mubr.f32.gmra.mrb[0].mxu0 %v134
    %v344 = vpop.f32.mrb[0].mxu0
    %v345 = vadd.f32 0.0, %v344
    %v346 = vpop.f32.mrb[0].mxu0
    %347 = vmatprep.mubr.f32.mxu0 0.0
    %348 = vmatmul.mubr.f32.gmra.mrb[0].mxu0 %v135
    %v349 = vpop.f32.mrb[0].mxu0
    %v350 = vadd.f32 0.0, %v349
    %v351 = vpop.f32.mrb[0].mxu0
    %352 = vmatprep.mubr.f32.mxu0 0.0
    %353 = vmatmul.mubr.f32.gmra.mrb[0].mxu0 %v136
    %v354 = vpop.f32.mrb[0].mxu0
    %v355 = vadd.f32 0.0, %v354
    %v356 = vpop.f32.mrb[0].mxu0
    %357 = vmatprep.mubr.f32.mxu0 0.0
    %358 = vmatmul.mubr.f32.gmra.mrb[0].mxu0 %v137
    %v359 = vpop.f32.mrb[0].mxu0
    %v360 = vadd.f32 0.0, %v359
    %v361 = vpop.f32.mrb[0].mxu0
    %362 = vmatprep.mubr.f32.mxu0 0.0
    %363 = vmatmul.mubr.f32.gmra.mrb[0].mxu0 %v138
    %v364 = vpop.f32.mrb[0].mxu0
    %v365 = vadd.f32 0.0, %v364
    %v366 = vpop.f32.mrb[0].mxu0
    %367 = vmatprep.mubr.f32.mxu0 0.0
    %368 = vmatmul.mubr.f32.gmra.mrb[0].mxu0 %v139
    %v369 = vpop.f32.mrb[0].mxu0
    %v370 = vadd.f32 0.0, %v369
    %v371 = vpop.f32.mrb[0].mxu0
    %372 = vmatprep.mubr.f32.mxu0 0.0
    %373 = vmatmul.mubr.f32.gmra.mrb[0].mxu0 %v140
    %v374 = vpop.f32.mrb[0].mxu0
    %v375 = vadd.f32 0.0, %v374
    %v376 = vpop.f32.mrb[0].mxu0
    %377 = vmatprep.mubr.f32.mxu0 0.0
    %378 = vmatmul.mubr.f32.gmra.mrb[0].mxu0 %v141
    %v379 = vpop.f32.mrb[0].mxu0
    %v380 = vadd.f32 0.0, %v379
    %v381 = vpop.f32.mrb[0].mxu0
    %382 = vdwg.mxu0
    %383 = vst [vmem:[#allocation13] sm:$0xff] %v225
    %384 = vst [vmem:[#allocation13 + $0x8] sm:$0xff] %v230
    %385 = vst [vmem:[#allocation13 + $0x10] sm:$0xff] %v235
    %386 = vst [vmem:[#allocation13 + $0x18] sm:$0xff] %v240
    %387 = vst [vmem:[#allocation13 + $0x20] sm:$0xff] %v245
    %388 = vst [vmem:[#allocation13 + $0x28] sm:$0xff] %v250
    %389 = vst [vmem:[#allocation13 + $0x30] sm:$0xff] %v255
    %390 = vst [vmem:[#allocation13 + $0x38] sm:$0xff] %v260
    %391 = vst [vmem:[#allocation13 + $0x40] sm:$0xff] %v265
    %392 = vst [vmem:[#allocation13 + $0x48] sm:$0xff] %v270
    %393 = vst [vmem:[#allocation13 + $0x50] sm:$0xff] %v275
    %394 = vst [vmem:[#allocation13 + $0x58] sm:$0xff] %v280
    %395 = vst [vmem:[#allocation13 + $0x60] sm:$0xff] %v285
    %396 = vst [vmem:[#allocation13 + $0x68] sm:$0xff] %v290
    %397 = vst [vmem:[#allocation13 + $0x70] sm:$0xff] %v295
    %398 = vst [vmem:[#allocation13 + $0x78] sm:$0xff] %v300
    %399 = vst [vmem:[#allocation13 + $0x80] sm:$0xff] %v305
    %400 = vst [vmem:[#allocation13 + $0x88] sm:$0xff] %v310
    %401 = vst [vmem:[#allocation13 + $0x90] sm:$0xff] %v315
    %402 = vst [vmem:[#allocation13 + $0x98] sm:$0xff] %v320
    %403 = vst [vmem:[#allocation13 + $0xa0] sm:$0xff] %v325
    %404 = vst [vmem:[#allocation13 + $0xa8] sm:$0xff] %v330
    %405 = vst [vmem:[#allocation13 + $0xb0] sm:$0xff] %v335
    %406 = vst [vmem:[#allocation13 + $0xb8] sm:$0xff] %v340
    %407 = vst [vmem:[#allocation13 + $0xc0] sm:$0xff] %v345
    %408 = vst [vmem:[#allocation13 + $0xc8] sm:$0xff] %v350
    %409 = vst [vmem:[#allocation13 + $0xd0] sm:$0xff] %v355
    %410 = vst [vmem:[#allocation13 + $0xd8] sm:$0xff] %v360
    %411 = vst [vmem:[#allocation13 + $0xe0] sm:$0xff] %v365
    %412 = vst [vmem:[#allocation13 + $0xe8] sm:$0xff] %v370
    %413 = vst [vmem:[#allocation13 + $0xf0] sm:$0xff] %v375
    %414 = vst [vmem:[#allocation13 + $0xf8] sm:$0xff] %v380
    %v415 = vld [vmem:[#allocation5] sm:$0xff]
    %v416 = vld [vmem:[#allocation5 + $0x8] sm:$0xff]
    %v417 = vld [vmem:[#allocation5 + $0x10] sm:$0xff]
    %v418 = vld [vmem:[#allocation5 + $0x18] sm:$0xff]
    %v419 = vld [vmem:[#allocation5 + $0x20] sm:$0xff]
    %v420 = vld [vmem:[#allocation5 + $0x28] sm:$0xff]
    %v421 = vld [vmem:[#allocation5 + $0x30] sm:$0xff]
    %v422 = vld [vmem:[#allocation5 + $0x38] sm:$0xff]
    %v423 = vld [vmem:[#allocation5 + $0x40] sm:$0xff]
    %v424 = vld [vmem:[#allocation5 + $0x48] sm:$0xff]
    %v425 = vld [vmem:[#allocation5 + $0x50] sm:$0xff]
    %v426 = vld [vmem:[#allocation5 + $0x58] sm:$0xff]
    %v427 = vld [vmem:[#allocation5 + $0x60] sm:$0xff]
    %v428 = vld [vmem:[#allocation5 + $0x68] sm:$0xff]
    %v429 = vld [vmem:[#allocation5 + $0x70] sm:$0xff]
    %v430 = vld [vmem:[#allocation5 + $0x78] sm:$0xff]
    %v431 = vld [vmem:[#allocation5 + $0x80] sm:$0xff]
    %v432 = vld [vmem:[#allocation5 + $0x88] sm:$0xff]
    %v433 = vld [vmem:[#allocation5 + $0x90] sm:$0xff]
    %v434 = vld [vmem:[#allocation5 + $0x98] sm:$0xff]
    %v435 = vld [vmem:[#allocation5 + $0xa0] sm:$0xff]
    %v436 = vld [vmem:[#allocation5 + $0xa8] sm:$0xff]
    %v437 = vld [vmem:[#allocation5 + $0xb0] sm:$0xff]
    %v438 = vld [vmem:[#allocation5 + $0xb8] sm:$0xff]
    %v439 = vld [vmem:[#allocation5 + $0xc0] sm:$0xff]
    %v440 = vld [vmem:[#allocation5 + $0xc8] sm:$0xff]
    %v441 = vld [vmem:[#allocation5 + $0xd0] sm:$0xff]
    %v442 = vld [vmem:[#allocation5 + $0xd8] sm:$0xff]
    %v443 = vld [vmem:[#allocation5 + $0xe0] sm:$0xff]
    %v444 = vld [vmem:[#allocation5 + $0xe8] sm:$0xff]
    %v445 = vld [vmem:[#allocation5 + $0xf0] sm:$0xff]
    %v446 = vld [vmem:[#allocation5 + $0xf8] sm:$0xff]
    %v447 = vld [vmem:[#allocation10] sm:$0xff]
    %v448 = vld [vmem:[#allocation10 + $0x8] sm:$0xff]
    %v449 = vld [vmem:[#allocation10 + $0x10] sm:$0xff]
    %v450 = vld [vmem:[#allocation10 + $0x18] sm:$0xff]
    %v451 = vld [vmem:[#allocation10 + $0x20] sm:$0xff]
    %v452 = vld [vmem:[#allocation10 + $0x28] sm:$0xff]
    %v453 = vld [vmem:[#allocation10 + $0x30] sm:$0xff]
    %v454 = vld [vmem:[#allocation10 + $0x38] sm:$0xff]
    %v455 = vld [vmem:[#allocation10 + $0x40] sm:$0xff]
    %v456 = vld [vmem:[#allocation10 + $0x48] sm:$0xff]
    %v457 = vld [vmem:[#allocation10 + $0x50] sm:$0xff]
    %v458 = vld [vmem:[#allocation10 + $0x58] sm:$0xff]
    %v459 = vld [vmem:[#allocation10 + $0x60] sm:$0xff]
    %v460 = vld [vmem:[#allocation10 + $0x68] sm:$0xff]
    %v461 = vld [vmem:[#allocation10 + $0x70] sm:$0xff]
    %v462 = vld [vmem:[#allocation10 + $0x78] sm:$0xff]
    %463 = vmatprep.subr.mxu0 0.0
    %464 = vmatpush1.msra.mxu0 %v447
    %465 = vmatprep.subr.mxu0 0.0
    %466 = vmatpush1.msra.mxu0 %v448
    %467 = vmatprep.subr.mxu0 0.0
    %468 = vmatpush1.msra.mxu0 %v449
    %469 = vmatprep.subr.mxu0 0.0
    %470 = vmatpush1.msra.mxu0 %v450
    %471 = vmatprep.subr.mxu0 0.0
    %472 = vmatpush1.msra.mxu0 %v451
    %473 = vmatprep.subr.mxu0 0.0
    %474 = vmatpush1.msra.mxu0 %v452
    %475 = vmatprep.subr.mxu0 0.0
    %476 = vmatpush1.msra.mxu0 %v453
    %477 = vmatprep.subr.mxu0 0.0
    %478 = vmatpush1.msra.mxu0 %v454
    %479 = vmatprep.subr.mxu0 0.0
    %480 = vmatpush1.msra.mxu0 %v455
    %481 = vmatprep.subr.mxu0 0.0
    %482 = vmatpush1.msra.mxu0 %v456
    %483 = vmatprep.subr.mxu0 0.0
    %484 = vmatpush1.msra.mxu0 %v457
    %485 = vmatprep.subr.mxu0 0.0
    %486 = vmatpush1.msra.mxu0 %v458
    %487 = vmatprep.subr.mxu0 0.0
    %488 = vmatpush1.msra.mxu0 %v459
    %489 = vmatprep.subr.mxu0 0.0
    %490 = vmatpush1.msra.mxu0 %v460
    %491 = vmatprep.subr.mxu0 0.0
    %492 = vmatpush1.msra.mxu0 %v461
    %493 = vmatprep.subr.mxu0 0.0
    %494 = vmatpush1.msra.mxu0 %v462
    %495 = vmatprep.subr.mxu0 0.0
    %496 = vmatpush1.msra.mxu0 0.0
    %497 = vmatprep.subr.mxu0 0.0
    %498 = vmatpush1.msra.mxu0 0.0
    %499 = vmatprep.subr.mxu0 0.0
    %500 = vmatpush1.msra.mxu0 0.0
    %501 = vmatprep.subr.mxu0 0.0
    %502 = vmatpush1.msra.mxu0 0.0
    %503 = vmatprep.subr.mxu0 0.0
    %504 = vmatpush1.msra.mxu0 0.0
    %505 = vmatprep.subr.mxu0 0.0
    %506 = vmatpush1.msra.mxu0 0.0
    %507 = vmatprep.subr.mxu0 0.0
    %508 = vmatpush1.msra.mxu0 0.0
    %509 = vmatprep.subr.mxu0 0.0
    %510 = vmatpush1.msra.mxu0 0.0
    %511 = vmatprep.subr.mxu0 0.0
    %512 = vmatpush1.msra.mxu0 0.0
    %513 = vmatprep.subr.mxu0 0.0
    %514 = vmatpush1.msra.mxu0 0.0
    %515 = vmatprep.subr.mxu0 0.0
    %516 = vmatpush1.msra.mxu0 0.0
    %517 = vmatprep.subr.mxu0 0.0
    %518 = vmatpush1.msra.mxu0 0.0
    %519 = vmatprep.subr.mxu0 0.0
    %520 = vmatpush1.msra.mxu0 0.0
    %521 = vmatprep.subr.mxu0 0.0
    %522 = vmatpush1.msra.mxu0 0.0
    %523 = vmatprep.subr.mxu0 0.0
    %524 = vmatpush1.msra.mxu0 0.0
    %525 = vmatprep.subr.mxu0 0.0
    %526 = vmatpush1.msra.mxu0 0.0
    %527 = vmatprep.mubr.f32.mxu0 0.0
    %528 = vmatmul.mubr.f32.gmra.mrb[0].mxu0 %v415
    %v529 = vpop.f32.mrb[0].mxu0
    %v530 = vadd.f32 0.0, %v529
    %v531 = vpop.f32.mrb[0].mxu0
    %532 = vmatprep.mubr.f32.mxu0 0.0
    %533 = vmatmul.mubr.f32.gmra.mrb[0].mxu0 %v416
    %v534 = vpop.f32.mrb[0].mxu0
    %v535 = vadd.f32 0.0, %v534
    %v536 = vpop.f32.mrb[0].mxu0
    %537 = vmatprep.mubr.f32.mxu0 0.0
    %538 = vmatmul.mubr.f32.gmra.mrb[0].mxu0 %v417
    %v539 = vpop.f32.mrb[0].mxu0
    %v540 = vadd.f32 0.0, %v539
    %v541 = vpop.f32.mrb[0].mxu0
    %542 = vmatprep.mubr.f32.mxu0 0.0
    %543 = vmatmul.mubr.f32.gmra.mrb[0].mxu0 %v418
    %v544 = vpop.f32.mrb[0].mxu0
    %v545 = vadd.f32 0.0, %v544
    %v546 = vpop.f32.mrb[0].mxu0
    %547 = vmatprep.mubr.f32.mxu0 0.0
    %548 = vmatmul.mubr.f32.gmra.mrb[0].mxu0 %v419
    %v549 = vpop.f32.mrb[0].mxu0
    %v550 = vadd.f32 0.0, %v549
    %v551 = vpop.f32.mrb[0].mxu0
    %552 = vmatprep.mubr.f32.mxu0 0.0
    %553 = vmatmul.mubr.f32.gmra.mrb[0].mxu0 %v420
    %v554 = vpop.f32.mrb[0].mxu0
    %v555 = vadd.f32 0.0, %v554
    %v556 = vpop.f32.mrb[0].mxu0
    %557 = vmatprep.mubr.f32.mxu0 0.0
    %558 = vmatmul.mubr.f32.gmra.mrb[0].mxu0 %v421
    %v559 = vpop.f32.mrb[0].mxu0
    %v560 = vadd.f32 0.0, %v559
    %v561 = vpop.f32.mrb[0].mxu0
    %562 = vmatprep.mubr.f32.mxu0 0.0
    %563 = vmatmul.mubr.f32.gmra.mrb[0].mxu0 %v422
    %v564 = vpop.f32.mrb[0].mxu0
    %v565 = vadd.f32 0.0, %v564
    %v566 = vpop.f32.mrb[0].mxu0
    %567 = vmatprep.mubr.f32.mxu0 0.0
    %568 = vmatmul.mubr.f32.gmra.mrb[0].mxu0 %v423
    %v569 = vpop.f32.mrb[0].mxu0
    %v570 = vadd.f32 0.0, %v569
    %v571 = vpop.f32.mrb[0].mxu0
    %572 = vmatprep.mubr.f32.mxu0 0.0
    %573 = vmatmul.mubr.f32.gmra.mrb[0].mxu0 %v424
    %v574 = vpop.f32.mrb[0].mxu0
    %v575 = vadd.f32 0.0, %v574
    %v576 = vpop.f32.mrb[0].mxu0
    %577 = vmatprep.mubr.f32.mxu0 0.0
    %578 = vmatmul.mubr.f32.gmra.mrb[0].mxu0 %v425
    %v579 = vpop.f32.mrb[0].mxu0
    %v580 = vadd.f32 0.0, %v579
    %v581 = vpop.f32.mrb[0].mxu0
    %582 = vmatprep.mubr.f32.mxu0 0.0
    %583 = vmatmul.mubr.f32.gmra.mrb[0].mxu0 %v426
    %v584 = vpop.f32.mrb[0].mxu0
    %v585 = vadd.f32 0.0, %v584
    %v586 = vpop.f32.mrb[0].mxu0
    %587 = vmatprep.mubr.f32.mxu0 0.0
    %588 = vmatmul.mubr.f32.gmra.mrb[0].mxu0 %v427
    %v589 = vpop.f32.mrb[0].mxu0
    %v590 = vadd.f32 0.0, %v589
    %v591 = vpop.f32.mrb[0].mxu0
    %592 = vmatprep.mubr.f32.mxu0 0.0
    %593 = vmatmul.mubr.f32.gmra.mrb[0].mxu0 %v428
    %v594 = vpop.f32.mrb[0].mxu0
    %v595 = vadd.f32 0.0, %v594
    %v596 = vpop.f32.mrb[0].mxu0
    %597 = vmatprep.mubr.f32.mxu0 0.0
    %598 = vmatmul.mubr.f32.gmra.mrb[0].mxu0 %v429
    %v599 = vpop.f32.mrb[0].mxu0
    %v600 = vadd.f32 0.0, %v599
    %v601 = vpop.f32.mrb[0].mxu0
    %602 = vmatprep.mubr.f32.mxu0 0.0
    %603 = vmatmul.mubr.f32.gmra.mrb[0].mxu0 %v430
    %v604 = vpop.f32.mrb[0].mxu0
    %v605 = vadd.f32 0.0, %v604
    %v606 = vpop.f32.mrb[0].mxu0
    %607 = vmatprep.mubr.f32.mxu0 0.0
    %608 = vmatmul.mubr.f32.gmra.mrb[0].mxu0 %v431
    %v609 = vpop.f32.mrb[0].mxu0
    %v610 = vadd.f32 0.0, %v609
    %v611 = vpop.f32.mrb[0].mxu0
    %612 = vmatprep.mubr.f32.mxu0 0.0
    %613 = vmatmul.mubr.f32.gmra.mrb[0].mxu0 %v432
    %v614 = vpop.f32.mrb[0].mxu0
    %v615 = vadd.f32 0.0, %v614
    %v616 = vpop.f32.mrb[0].mxu0
    %617 = vmatprep.mubr.f32.mxu0 0.0
    %618 = vmatmul.mubr.f32.gmra.mrb[0].mxu0 %v433
    %v619 = vpop.f32.mrb[0].mxu0
    %v620 = vadd.f32 0.0, %v619
    %v621 = vpop.f32.mrb[0].mxu0
    %622 = vmatprep.mubr.f32.mxu0 0.0
    %623 = vmatmul.mubr.f32.gmra.mrb[0].mxu0 %v434
    %v624 = vpop.f32.mrb[0].mxu0
    %v625 = vadd.f32 0.0, %v624
    %v626 = vpop.f32.mrb[0].mxu0
    %627 = vmatprep.mubr.f32.mxu0 0.0
    %628 = vmatmul.mubr.f32.gmra.mrb[0].mxu0 %v435
    %v629 = vpop.f32.mrb[0].mxu0
    %v630 = vadd.f32 0.0, %v629
    %v631 = vpop.f32.mrb[0].mxu0
    %632 = vmatprep.mubr.f32.mxu0 0.0
    %633 = vmatmul.mubr.f32.gmra.mrb[0].mxu0 %v436
    %v634 = vpop.f32.mrb[0].mxu0
    %v635 = vadd.f32 0.0, %v634
    %v636 = vpop.f32.mrb[0].mxu0
    %637 = vmatprep.mubr.f32.mxu0 0.0
    %638 = vmatmul.mubr.f32.gmra.mrb[0].mxu0 %v437
    %v639 = vpop.f32.mrb[0].mxu0
    %v640 = vadd.f32 0.0, %v639
    %v641 = vpop.f32.mrb[0].mxu0
    %642 = vmatprep.mubr.f32.mxu0 0.0
    %643 = vmatmul.mubr.f32.gmra.mrb[0].mxu0 %v438
    %v644 = vpop.f32.mrb[0].mxu0
    %v645 = vadd.f32 0.0, %v644
    %v646 = vpop.f32.mrb[0].mxu0
    %647 = vmatprep.mubr.f32.mxu0 0.0
    %648 = vmatmul.mubr.f32.gmra.mrb[0].mxu0 %v439
    %v649 = vpop.f32.mrb[0].mxu0
    %v650 = vadd.f32 0.0, %v649
    %v651 = vpop.f32.mrb[0].mxu0
    %652 = vmatprep.mubr.f32.mxu0 0.0
    %653 = vmatmul.mubr.f32.gmra.mrb[0].mxu0 %v440
    %v654 = vpop.f32.mrb[0].mxu0
    %v655 = vadd.f32 0.0, %v654
    %v656 = vpop.f32.mrb[0].mxu0
    %657 = vmatprep.mubr.f32.mxu0 0.0
    %658 = vmatmul.mubr.f32.gmra.mrb[0].mxu0 %v441
    %v659 = vpop.f32.mrb[0].mxu0
    %v660 = vadd.f32 0.0, %v659
    %v661 = vpop.f32.mrb[0].mxu0
    %662 = vmatprep.mubr.f32.mxu0 0.0
    %663 = vmatmul.mubr.f32.gmra.mrb[0].mxu0 %v442
    %v664 = vpop.f32.mrb[0].mxu0
    %v665 = vadd.f32 0.0, %v664
    %v666 = vpop.f32.mrb[0].mxu0
    %667 = vmatprep.mubr.f32.mxu0 0.0
    %668 = vmatmul.mubr.f32.gmra.mrb[0].mxu0 %v443
    %v669 = vpop.f32.mrb[0].mxu0
    %v670 = vadd.f32 0.0, %v669
    %v671 = vpop.f32.mrb[0].mxu0
    %672 = vmatprep.mubr.f32.mxu0 0.0
    %673 = vmatmul.mubr.f32.gmra.mrb[0].mxu0 %v444
    %v674 = vpop.f32.mrb[0].mxu0
    %v675 = vadd.f32 0.0, %v674
    %v676 = vpop.f32.mrb[0].mxu0
    %677 = vmatprep.mubr.f32.mxu0 0.0
    %678 = vmatmul.mubr.f32.gmra.mrb[0].mxu0 %v445
    %v679 = vpop.f32.mrb[0].mxu0
    %v680 = vadd.f32 0.0, %v679
    %v681 = vpop.f32.mrb[0].mxu0
    %682 = vmatprep.mubr.f32.mxu0 0.0
    %683 = vmatmul.mubr.f32.gmra.mrb[0].mxu0 %v446
    %v684 = vpop.f32.mrb[0].mxu0
    %v685 = vadd.f32 0.0, %v684
    %v686 = vpop.f32.mrb[0].mxu0
    %687 = vdwg.mxu0
    %688 = vst [vmem:[#allocation14] sm:$0xff] %v530
    %689 = vst [vmem:[#allocation14 + $0x8] sm:$0xff] %v535
    %690 = vst [vmem:[#allocation14 + $0x10] sm:$0xff] %v540
    %691 = vst [vmem:[#allocation14 + $0x18] sm:$0xff] %v545
    %692 = vst [vmem:[#allocation14 + $0x20] sm:$0xff] %v550
    %693 = vst [vmem:[#allocation14 + $0x28] sm:$0xff] %v555
    %694 = vst [vmem:[#allocation14 + $0x30] sm:$0xff] %v560
    %695 = vst [vmem:[#allocation14 + $0x38] sm:$0xff] %v565
    %696 = vst [vmem:[#allocation14 + $0x40] sm:$0xff] %v570
    %697 = vst [vmem:[#allocation14 + $0x48] sm:$0xff] %v575
    %698 = vst [vmem:[#allocation14 + $0x50] sm:$0xff] %v580
    %699 = vst [vmem:[#allocation14 + $0x58] sm:$0xff] %v585
    %700 = vst [vmem:[#allocation14 + $0x60] sm:$0xff] %v590
    %701 = vst [vmem:[#allocation14 + $0x68] sm:$0xff] %v595
    %702 = vst [vmem:[#allocation14 + $0x70] sm:$0xff] %v600
    %703 = vst [vmem:[#allocation14 + $0x78] sm:$0xff] %v605
    %704 = vst [vmem:[#allocation14 + $0x80] sm:$0xff] %v610
    %705 = vst [vmem:[#allocation14 + $0x88] sm:$0xff] %v615
    %706 = vst [vmem:[#allocation14 + $0x90] sm:$0xff] %v620
    %707 = vst [vmem:[#allocation14 + $0x98] sm:$0xff] %v625
    %708 = vst [vmem:[#allocation14 + $0xa0] sm:$0xff] %v630
    %709 = vst [vmem:[#allocation14 + $0xa8] sm:$0xff] %v635
    %710 = vst [vmem:[#allocation14 + $0xb0] sm:$0xff] %v640
    %711 = vst [vmem:[#allocation14 + $0xb8] sm:$0xff] %v645
    %712 = vst [vmem:[#allocation14 + $0xc0] sm:$0xff] %v650
    %713 = vst [vmem:[#allocation14 + $0xc8] sm:$0xff] %v655
    %714 = vst [vmem:[#allocation14 + $0xd0] sm:$0xff] %v660
    %715 = vst [vmem:[#allocation14 + $0xd8] sm:$0xff] %v665
    %716 = vst [vmem:[#allocation14 + $0xe0] sm:$0xff] %v670
    %717 = vst [vmem:[#allocation14 + $0xe8] sm:$0xff] %v675
    %718 = vst [vmem:[#allocation14 + $0xf0] sm:$0xff] %v680
    %719 = vst [vmem:[#allocation14 + $0xf8] sm:$0xff] %v685
    %v720 = vld [vmem:[#allocation7] sm:$0xff]
    %v721 = vld [vmem:[#allocation7 + $0x8] sm:$0xff]
    %v722 = vld [vmem:[#allocation7 + $0x10] sm:$0xff]
    %v723 = vld [vmem:[#allocation7 + $0x18] sm:$0xff]
    %v724 = vld [vmem:[#allocation7 + $0x20] sm:$0xff]
    %v725 = vld [vmem:[#allocation7 + $0x28] sm:$0xff]
    %v726 = vld [vmem:[#allocation7 + $0x30] sm:$0xff]
    %v727 = vld [vmem:[#allocation7 + $0x38] sm:$0xff]
    %v728 = vld [vmem:[#allocation7 + $0x40] sm:$0xff]
    %v729 = vld [vmem:[#allocation7 + $0x48] sm:$0xff]
    %v730 = vld [vmem:[#allocation7 + $0x50] sm:$0xff]
    %v731 = vld [vmem:[#allocation7 + $0x58] sm:$0xff]
    %v732 = vld [vmem:[#allocation7 + $0x60] sm:$0xff]
    %v733 = vld [vmem:[#allocation7 + $0x68] sm:$0xff]
    %v734 = vld [vmem:[#allocation7 + $0x70] sm:$0xff]
    %v735 = vld [vmem:[#allocation7 + $0x78] sm:$0xff]
    %v736 = vld [vmem:[#allocation7 + $0x80] sm:$0xff]
    %v737 = vld [vmem:[#allocation7 + $0x88] sm:$0xff]
    %v738 = vld [vmem:[#allocation7 + $0x90] sm:$0xff]
    %v739 = vld [vmem:[#allocation7 + $0x98] sm:$0xff]
    %v740 = vld [vmem:[#allocation7 + $0xa0] sm:$0xff]
    %v741 = vld [vmem:[#allocation7 + $0xa8] sm:$0xff]
    %v742 = vld [vmem:[#allocation7 + $0xb0] sm:$0xff]
    %v743 = vld [vmem:[#allocation7 + $0xb8] sm:$0xff]
    %v744 = vld [vmem:[#allocation7 + $0xc0] sm:$0xff]
    %v745 = vld [vmem:[#allocation7 + $0xc8] sm:$0xff]
    %v746 = vld [vmem:[#allocation7 + $0xd0] sm:$0xff]
    %v747 = vld [vmem:[#allocation7 + $0xd8] sm:$0xff]
    %v748 = vld [vmem:[#allocation7 + $0xe0] sm:$0xff]
    %v749 = vld [vmem:[#allocation7 + $0xe8] sm:$0xff]
    %v750 = vld [vmem:[#allocation7 + $0xf0] sm:$0xff]
    %v751 = vld [vmem:[#allocation7 + $0xf8] sm:$0xff]
    %v752 = vld [vmem:[#allocation11] sm:$0xff]
    %v753 = vld [vmem:[#allocation11 + $0x8] sm:$0xff]
    %v754 = vld [vmem:[#allocation11 + $0x10] sm:$0xff]
    %v755 = vld [vmem:[#allocation11 + $0x18] sm:$0xff]
    %v756 = vld [vmem:[#allocation11 + $0x20] sm:$0xff]
    %v757 = vld [vmem:[#allocation11 + $0x28] sm:$0xff]
    %v758 = vld [vmem:[#allocation11 + $0x30] sm:$0xff]
    %v759 = vld [vmem:[#allocation11 + $0x38] sm:$0xff]
    %v760 = vld [vmem:[#allocation11 + $0x40] sm:$0xff]
    %v761 = vld [vmem:[#allocation11 + $0x48] sm:$0xff]
    %v762 = vld [vmem:[#allocation11 + $0x50] sm:$0xff]
    %v763 = vld [vmem:[#allocation11 + $0x58] sm:$0xff]
    %v764 = vld [vmem:[#allocation11 + $0x60] sm:$0xff]
    %v765 = vld [vmem:[#allocation11 + $0x68] sm:$0xff]
    %v766 = vld [vmem:[#allocation11 + $0x70] sm:$0xff]
    %v767 = vld [vmem:[#allocation11 + $0x78] sm:$0xff]
    %768 = vmatprep.subr.mxu0 0.0
    %769 = vmatpush1.msra.mxu0 %v752
    %770 = vmatprep.subr.mxu0 0.0
    %771 = vmatpush1.msra.mxu0 %v753
    %772 = vmatprep.subr.mxu0 0.0
    %773 = vmatpush1.msra.mxu0 %v754
    %774 = vmatprep.subr.mxu0 0.0
    %775 = vmatpush1.msra.mxu0 %v755
    %776 = vmatprep.subr.mxu0 0.0
    %777 = vmatpush1.msra.mxu0 %v756
    %778 = vmatprep.subr.mxu0 0.0
    %779 = vmatpush1.msra.mxu0 %v757
    %780 = vmatprep.subr.mxu0 0.0
    %781 = vmatpush1.msra.mxu0 %v758
    %782 = vmatprep.subr.mxu0 0.0
    %783 = vmatpush1.msra.mxu0 %v759
    %784 = vmatprep.subr.mxu0 0.0
    %785 = vmatpush1.msra.mxu0 %v760
    %786 = vmatprep.subr.mxu0 0.0
    %787 = vmatpush1.msra.mxu0 %v761
    %788 = vmatprep.subr.mxu0 0.0
    %789 = vmatpush1.msra.mxu0 %v762
    %790 = vmatprep.subr.mxu0 0.0
    %791 = vmatpush1.msra.mxu0 %v763
    %792 = vmatprep.subr.mxu0 0.0
    %793 = vmatpush1.msra.mxu0 %v764
    %794 = vmatprep.subr.mxu0 0.0
    %795 = vmatpush1.msra.mxu0 %v765
    %796 = vmatprep.subr.mxu0 0.0
    %797 = vmatpush1.msra.mxu0 %v766
    %798 = vmatprep.subr.mxu0 0.0
    %799 = vmatpush1.msra.mxu0 %v767
    %800 = vmatprep.subr.mxu0 0.0
    %801 = vmatpush1.msra.mxu0 0.0
    %802 = vmatprep.subr.mxu0 0.0
    %803 = vmatpush1.msra.mxu0 0.0
    %804 = vmatprep.subr.mxu0 0.0
    %805 = vmatpush1.msra.mxu0 0.0
    %806 = vmatprep.subr.mxu0 0.0
    %807 = vmatpush1.msra.mxu0 0.0
    %808 = vmatprep.subr.mxu0 0.0
    %809 = vmatpush1.msra.mxu0 0.0
    %810 = vmatprep.subr.mxu0 0.0
    %811 = vmatpush1.msra.mxu0 0.0
    %812 = vmatprep.subr.mxu0 0.0
    %813 = vmatpush1.msra.mxu0 0.0
    %814 = vmatprep.subr.mxu0 0.0
    %815 = vmatpush1.msra.mxu0 0.0
    %816 = vmatprep.subr.mxu0 0.0
    %817 = vmatpush1.msra.mxu0 0.0
    %818 = vmatprep.subr.mxu0 0.0
    %819 = vmatpush1.msra.mxu0 0.0
    %820 = vmatprep.subr.mxu0 0.0
    %821 = vmatpush1.msra.mxu0 0.0
    %822 = vmatprep.subr.mxu0 0.0
    %823 = vmatpush1.msra.mxu0 0.0
    %824 = vmatprep.subr.mxu0 0.0
    %825 = vmatpush1.msra.mxu0 0.0
    %826 = vmatprep.subr.mxu0 0.0
    %827 = vmatpush1.msra.mxu0 0.0
    %828 = vmatprep.subr.mxu0 0.0
    %829 = vmatpush1.msra.mxu0 0.0
    %830 = vmatprep.subr.mxu0 0.0
    %831 = vmatpush1.msra.mxu0 0.0
    %832 = vmatprep.mubr.f32.mxu0 0.0
    %833 = vmatmul.mubr.f32.gmra.mrb[0].mxu0 %v720
    %v834 = vpop.f32.mrb[0].mxu0
    %v835 = vadd.f32 0.0, %v834
    %v836 = vpop.f32.mrb[0].mxu0
    %837 = vmatprep.mubr.f32.mxu0 0.0
    %838 = vmatmul.mubr.f32.gmra.mrb[0].mxu0 %v721
    %v839 = vpop.f32.mrb[0].mxu0
    %v840 = vadd.f32 0.0, %v839
    %v841 = vpop.f32.mrb[0].mxu0
    %842 = vmatprep.mubr.f32.mxu0 0.0
    %843 = vmatmul.mubr.f32.gmra.mrb[0].mxu0 %v722
    %v844 = vpop.f32.mrb[0].mxu0
    %v845 = vadd.f32 0.0, %v844
    %v846 = vpop.f32.mrb[0].mxu0
    %847 = vmatprep.mubr.f32.mxu0 0.0
    %848 = vmatmul.mubr.f32.gmra.mrb[0].mxu0 %v723
    %v849 = vpop.f32.mrb[0].mxu0
    %v850 = vadd.f32 0.0, %v849
    %v851 = vpop.f32.mrb[0].mxu0
    %852 = vmatprep.mubr.f32.mxu0 0.0
    %853 = vmatmul.mubr.f32.gmra.mrb[0].mxu0 %v724
    %v854 = vpop.f32.mrb[0].mxu0
    %v855 = vadd.f32 0.0, %v854
    %v856 = vpop.f32.mrb[0].mxu0
    %857 = vmatprep.mubr.f32.mxu0 0.0
    %858 = vmatmul.mubr.f32.gmra.mrb[0].mxu0 %v725
    %v859 = vpop.f32.mrb[0].mxu0
    %v860 = vadd.f32 0.0, %v859
    %v861 = vpop.f32.mrb[0].mxu0
    %862 = vmatprep.mubr.f32.mxu0 0.0
    %863 = vmatmul.mubr.f32.gmra.mrb[0].mxu0 %v726
    %v864 = vpop.f32.mrb[0].mxu0
    %v865 = vadd.f32 0.0, %v864
    %v866 = vpop.f32.mrb[0].mxu0
    %867 = vmatprep.mubr.f32.mxu0 0.0
    %868 = vmatmul.mubr.f32.gmra.mrb[0].mxu0 %v727
    %v869 = vpop.f32.mrb[0].mxu0
    %v870 = vadd.f32 0.0, %v869
    %v871 = vpop.f32.mrb[0].mxu0
    %872 = vmatprep.mubr.f32.mxu0 0.0
    %873 = vmatmul.mubr.f32.gmra.mrb[0].mxu0 %v728
    %v874 = vpop.f32.mrb[0].mxu0
    %v875 = vadd.f32 0.0, %v874
    %v876 = vpop.f32.mrb[0].mxu0
    %877 = vmatprep.mubr.f32.mxu0 0.0
    %878 = vmatmul.mubr.f32.gmra.mrb[0].mxu0 %v729
    %v879 = vpop.f32.mrb[0].mxu0
    %v880 = vadd.f32 0.0, %v879
    %v881 = vpop.f32.mrb[0].mxu0
    %882 = vmatprep.mubr.f32.mxu0 0.0
    %883 = vmatmul.mubr.f32.gmra.mrb[0].mxu0 %v730
    %v884 = vpop.f32.mrb[0].mxu0
    %v885 = vadd.f32 0.0, %v884
    %v886 = vpop.f32.mrb[0].mxu0
    %887 = vmatprep.mubr.f32.mxu0 0.0
    %888 = vmatmul.mubr.f32.gmra.mrb[0].mxu0 %v731
    %v889 = vpop.f32.mrb[0].mxu0
    %v890 = vadd.f32 0.0, %v889
    %v891 = vpop.f32.mrb[0].mxu0
    %892 = vmatprep.mubr.f32.mxu0 0.0
    %893 = vmatmul.mubr.f32.gmra.mrb[0].mxu0 %v732
    %v894 = vpop.f32.mrb[0].mxu0
    %v895 = vadd.f32 0.0, %v894
    %v896 = vpop.f32.mrb[0].mxu0
    %897 = vmatprep.mubr.f32.mxu0 0.0
    %898 = vmatmul.mubr.f32.gmra.mrb[0].mxu0 %v733
    %v899 = vpop.f32.mrb[0].mxu0
    %v900 = vadd.f32 0.0, %v899
    %v901 = vpop.f32.mrb[0].mxu0
    %902 = vmatprep.mubr.f32.mxu0 0.0
    %903 = vmatmul.mubr.f32.gmra.mrb[0].mxu0 %v734
    %v904 = vpop.f32.mrb[0].mxu0
    %v905 = vadd.f32 0.0, %v904
    %v906 = vpop.f32.mrb[0].mxu0
    %907 = vmatprep.mubr.f32.mxu0 0.0
    %908 = vmatmul.mubr.f32.gmra.mrb[0].mxu0 %v735
    %v909 = vpop.f32.mrb[0].mxu0
    %v910 = vadd.f32 0.0, %v909
    %v911 = vpop.f32.mrb[0].mxu0
    %912 = vmatprep.mubr.f32.mxu0 0.0
    %913 = vmatmul.mubr.f32.gmra.mrb[0].mxu0 %v736
    %v914 = vpop.f32.mrb[0].mxu0
    %v915 = vadd.f32 0.0, %v914
    %v916 = vpop.f32.mrb[0].mxu0
    %917 = vmatprep.mubr.f32.mxu0 0.0
    %918 = vmatmul.mubr.f32.gmra.mrb[0].mxu0 %v737
    %v919 = vpop.f32.mrb[0].mxu0
    %v920 = vadd.f32 0.0, %v919
    %v921 = vpop.f32.mrb[0].mxu0
    %922 = vmatprep.mubr.f32.mxu0 0.0
    %923 = vmatmul.mubr.f32.gmra.mrb[0].mxu0 %v738
    %v924 = vpop.f32.mrb[0].mxu0
    %v925 = vadd.f32 0.0, %v924
    %v926 = vpop.f32.mrb[0].mxu0
    %927 = vmatprep.mubr.f32.mxu0 0.0
    %928 = vmatmul.mubr.f32.gmra.mrb[0].mxu0 %v739
    %v929 = vpop.f32.mrb[0].mxu0
    %v930 = vadd.f32 0.0, %v929
    %v931 = vpop.f32.mrb[0].mxu0
    %932 = vmatprep.mubr.f32.mxu0 0.0
    %933 = vmatmul.mubr.f32.gmra.mrb[0].mxu0 %v740
    %v934 = vpop.f32.mrb[0].mxu0
    %v935 = vadd.f32 0.0, %v934
    %v936 = vpop.f32.mrb[0].mxu0
    %937 = vmatprep.mubr.f32.mxu0 0.0
    %938 = vmatmul.mubr.f32.gmra.mrb[0].mxu0 %v741
    %v939 = vpop.f32.mrb[0].mxu0
    %v940 = vadd.f32 0.0, %v939
    %v941 = vpop.f32.mrb[0].mxu0
    %942 = vmatprep.mubr.f32.mxu0 0.0
    %943 = vmatmul.mubr.f32.gmra.mrb[0].mxu0 %v742
    %v944 = vpop.f32.mrb[0].mxu0
    %v945 = vadd.f32 0.0, %v944
    %v946 = vpop.f32.mrb[0].mxu0
    %947 = vmatprep.mubr.f32.mxu0 0.0
    %948 = vmatmul.mubr.f32.gmra.mrb[0].mxu0 %v743
    %v949 = vpop.f32.mrb[0].mxu0
    %v950 = vadd.f32 0.0, %v949
    %v951 = vpop.f32.mrb[0].mxu0
    %952 = vmatprep.mubr.f32.mxu0 0.0
    %953 = vmatmul.mubr.f32.gmra.mrb[0].mxu0 %v744
    %v954 = vpop.f32.mrb[0].mxu0
    %v955 = vadd.f32 0.0, %v954
    %v956 = vpop.f32.mrb[0].mxu0
    %957 = vmatprep.mubr.f32.mxu0 0.0
    %958 = vmatmul.mubr.f32.gmra.mrb[0].mxu0 %v745
    %v959 = vpop.f32.mrb[0].mxu0
    %v960 = vadd.f32 0.0, %v959
    %v961 = vpop.f32.mrb[0].mxu0
    %962 = vmatprep.mubr.f32.mxu0 0.0
    %963 = vmatmul.mubr.f32.gmra.mrb[0].mxu0 %v746
    %v964 = vpop.f32.mrb[0].mxu0
    %v965 = vadd.f32 0.0, %v964
    %v966 = vpop.f32.mrb[0].mxu0
    %967 = vmatprep.mubr.f32.mxu0 0.0
    %968 = vmatmul.mubr.f32.gmra.mrb[0].mxu0 %v747
    %v969 = vpop.f32.mrb[0].mxu0
    %v970 = vadd.f32 0.0, %v969
    %v971 = vpop.f32.mrb[0].mxu0
    %972 = vmatprep.mubr.f32.mxu0 0.0
    %973 = vmatmul.mubr.f32.gmra.mrb[0].mxu0 %v748
    %v974 = vpop.f32.mrb[0].mxu0
    %v975 = vadd.f32 0.0, %v974
    %v976 = vpop.f32.mrb[0].mxu0
    %977 = vmatprep.mubr.f32.mxu0 0.0
    %978 = vmatmul.mubr.f32.gmra.mrb[0].mxu0 %v749
    %v979 = vpop.f32.mrb[0].mxu0
    %v980 = vadd.f32 0.0, %v979
    %v981 = vpop.f32.mrb[0].mxu0
    %982 = vmatprep.mubr.f32.mxu0 0.0
    %983 = vmatmul.mubr.f32.gmra.mrb[0].mxu0 %v750
    %v984 = vpop.f32.mrb[0].mxu0
    %v985 = vadd.f32 0.0, %v984
    %v986 = vpop.f32.mrb[0].mxu0
    %987 = vmatprep.mubr.f32.mxu0 0.0
    %988 = vmatmul.mubr.f32.gmra.mrb[0].mxu0 %v751
    %v989 = vpop.f32.mrb[0].mxu0
    %v990 = vadd.f32 0.0, %v989
    %v991 = vpop.f32.mrb[0].mxu0
    %992 = vdwg.mxu0
    %993 = vst [vmem:[#allocation16] sm:$0xff] %v835
    %994 = vst [vmem:[#allocation16 + $0x8] sm:$0xff] %v840
    %995 = vst [vmem:[#allocation16 + $0x10] sm:$0xff] %v845
    %996 = vst [vmem:[#allocation16 + $0x18] sm:$0xff] %v850
    %997 = vst [vmem:[#allocation16 + $0x20] sm:$0xff] %v855
    %998 = vst [vmem:[#allocation16 + $0x28] sm:$0xff] %v860
    %999 = vst [vmem:[#allocation16 + $0x30] sm:$0xff] %v865
    %1000 = vst [vmem:[#allocation16 + $0x38] sm:$0xff] %v870
    %1001 = vst [vmem:[#allocation16 + $0x40] sm:$0xff] %v875
    %1002 = vst [vmem:[#allocation16 + $0x48] sm:$0xff] %v880
    %1003 = vst [vmem:[#allocation16 + $0x50] sm:$0xff] %v885
    %1004 = vst [vmem:[#allocation16 + $0x58] sm:$0xff] %v890
    %1005 = vst [vmem:[#allocation16 + $0x60] sm:$0xff] %v895
    %1006 = vst [vmem:[#allocation16 + $0x68] sm:$0xff] %v900
    %1007 = vst [vmem:[#allocation16 + $0x70] sm:$0xff] %v905
    %1008 = vst [vmem:[#allocation16 + $0x78] sm:$0xff] %v910
    %1009 = vst [vmem:[#allocation16 + $0x80] sm:$0xff] %v915
    %1010 = vst [vmem:[#allocation16 + $0x88] sm:$0xff] %v920
    %1011 = vst [vmem:[#allocation16 + $0x90] sm:$0xff] %v925
    %1012 = vst [vmem:[#allocation16 + $0x98] sm:$0xff] %v930
    %1013 = vst [vmem:[#allocation16 + $0xa0] sm:$0xff] %v935
    %1014 = vst [vmem:[#allocation16 + $0xa8] sm:$0xff] %v940
    %1015 = vst [vmem:[#allocation16 + $0xb0] sm:$0xff] %v945
    %1016 = vst [vmem:[#allocation16 + $0xb8] sm:$0xff] %v950
    %1017 = vst [vmem:[#allocation16 + $0xc0] sm:$0xff] %v955
    %1018 = vst [vmem:[#allocation16 + $0xc8] sm:$0xff] %v960
    %1019 = vst [vmem:[#allocation16 + $0xd0] sm:$0xff] %v965
    %1020 = vst [vmem:[#allocation16 + $0xd8] sm:$0xff] %v970
    %1021 = vst [vmem:[#allocation16 + $0xe0] sm:$0xff] %v975
    %1022 = vst [vmem:[#allocation16 + $0xe8] sm:$0xff] %v980
    %1023 = vst [vmem:[#allocation16 + $0xf0] sm:$0xff] %v985
    %1024 = vst [vmem:[#allocation16 + $0xf8] sm:$0xff] %v990
    // Predicated region
    $region50: #{tpu_custom_call.1} parent=1 // pred_check
      _
    $region51: #{tpu_custom_call.1} parent=1 // pred_check_branch
      %1026 = sbr.rel (0) target = $region53
    $region52: #{tpu_custom_call.1} parent=1 // pred_region
      %s1028 = ssub.s32 4096, 4096
      %1029 = vsyncadd [#allocation4], %s1028
      %s1030 = sshll.u32 [#allocation13], 4
      %s1031 = int_to_ptr.vmem [resolvable:$true] %s1030
      %1036 = dma.vmem_to_hbm [thread:$0]  %s1031, 4096, %s6, [#allocation4], 128, 128, 8
    $region53: #{tpu_custom_call.1} parent=1 // pred_fallthru
      _
    // Predicated region
    $region54: #{tpu_custom_call.1} parent=1 // pred_check
      _
    $region55: #{tpu_custom_call.1} parent=1 // pred_check_branch
      %1038 = sbr.rel (0) target = $region57
    $region56: #{tpu_custom_call.1} parent=1 // pred_region
      %s1040 = ssub.s32 4096, 4096
      %1041 = vsyncadd [#allocation15], %s1040
      %s1042 = sshll.u32 [#allocation14], 4
      %s1043 = int_to_ptr.vmem [resolvable:$true] %s1042
      %1048 = dma.vmem_to_hbm [thread:$0]  %s1043, 4096, %s7, [#allocation15], 128, 128, 8
    $region57: #{tpu_custom_call.1} parent=1 // pred_fallthru
      _
    // Predicated region
    $region58: #{tpu_custom_call.1} parent=1 // pred_check
      _
    $region59: #{tpu_custom_call.1} parent=1 // pred_check_branch
      %1050 = sbr.rel (0) target = $region61
    $region60: #{tpu_custom_call.1} parent=1 // pred_region
      %s1052 = ssub.s32 4096, 4096
      %1053 = vsyncadd [#allocation15], %s1052
      %s1054 = sshll.u32 [#allocation16], 4
      %s1055 = int_to_ptr.vmem [resolvable:$true] %s1054
      %1060 = dma.vmem_to_hbm [thread:$0]  %s1055, 4096, %s8, [#allocation15], 128, 128, 8
    $region61: #{tpu_custom_call.1} parent=1 // pred_fallthru
      _
    // Predicated region
    $region62: #{tpu_custom_call.1} parent=1 // pred_check
      _
    $region63: #{tpu_custom_call.1} parent=1 // pred_check_branch
      %1062 = sbr.rel (0) target = $region65
    $region64: #{tpu_custom_call.1} parent=1 // pred_region
      %1063 = dma.done [#allocation4], 4096
    $region65: #{tpu_custom_call.1} parent=1 // pred_fallthru
      _
    // Predicated region
    $region66: #{tpu_custom_call.1} parent=1 // pred_check
      _
    $region67: #{tpu_custom_call.1} parent=1 // pred_check_branch
      %1065 = sbr.rel (0) target = $region69
    $region68: #{tpu_custom_call.1} parent=1 // pred_region
      %1066 = dma.done [#allocation15], 4096
    $region69: #{tpu_custom_call.1} parent=1 // pred_fallthru
      _
    // Predicated region
    $region70: #{tpu_custom_call.1} parent=1 // pred_check
      _
    $region71: #{tpu_custom_call.1} parent=1 // pred_check_branch
      %1068 = sbr.rel (0) target = $region73
    $region72: #{tpu_custom_call.1} parent=1 // pred_region
      %1069 = dma.done [#allocation15], 4096
    $region73: #{tpu_custom_call.1} parent=1 // pred_fallthru
      _
    %1070 = vsyncpa [#allocation3], 1
    %1071 = vsyncpa [#allocation6], 1
    %1072 = vsyncpa [#allocation9], 1
    %1073 = vsyncpa [#allocation12], 1
    %1074 = vsyncpa [#allocation4], 1
    %1075 = vsyncpa [#allocation15], 1

// kernel: tpu_custom_call.1
$region0: #{tpu_custom_call.1}
  #allocation0 [shape = 'u32[]', space=smem, size = 0x4, offset = 0x4, fixed_abs, tag = 'smem constant byte address 0x4 - core index']
  #allocation1 [shape = 'u32[144,128]{1,0:T(1,128)}', space=vmem, size = 0x12000, scoped, tag = 'internal scratch']
  %s0 = inlined_call_operand.hbm [shape: f32[256,128], index: 0, kind: input, shape index: {}]
  %s1 = inlined_call_operand.hbm [shape: f32[256,128], index: 1, kind: input, shape index: {}]
  %s2 = inlined_call_operand.hbm [shape: f32[256,128], index: 2, kind: input, shape index: {}]
  %s3 = inlined_call_operand.hbm [shape: f32[128,128], index: 3, kind: input, shape index: {}]
  %s4 = inlined_call_operand.hbm [shape: f32[128,128], index: 4, kind: input, shape index: {}]
  %s5 = inlined_call_operand.hbm [shape: f32[128,128], index: 5, kind: input, shape index: {}]
  %s6 = inlined_call_operand.hbm [shape: f32[256,128], index: 6, kind: output, shape index: {0}]
  %s7 = inlined_call_operand.hbm [shape: f32[256,128], index: 7, kind: output, shape index: {1}]
  %s8 = inlined_call_operand.hbm [shape: f32[256,128], index: 8, kind: output, shape index: {2}]
  %9 = xla_tuple %s6, %s7, %s8
  %s10 = sld [smem:[#allocation0]]
  $region74: #{tpu_custom_call.1} parent=0
    _
  %s12 = ssub.s32 1, %s10
  %s13 = scalar_select 0, %s12, %s10
  $region1: #{tpu_custom_call.1} parent=0
    #allocation2 [shape = 'u8[131072]{0}', space=vmem, size = 0x20000, scoped, tag = 'input window, operand 0, single buffered']
    #allocation3 [shape = 's32[1]{0}', space=sflag, size = 0x4, scoped, tag = 'scoped memory for tpu_custom_call.1']
    #allocation4 [shape = 's32[1]{0}', space=sflag, size = 0x4, scoped, tag = 'scoped memory for tpu_custom_call.1']
    #allocation5 [shape = 'u8[131072]{0}', space=vmem, size = 0x20000, scoped, tag = 'input window, operand 1, single buffered']
    #allocation6 [shape = 's32[1]{0}', space=sflag, size = 0x4, scoped, tag = 'scoped memory for tpu_custom_call.1']
    #allocation7 [shape = 'u8[131072]{0}', space=vmem, size = 0x20000, scoped, tag = 'input window, operand 2, single buffered']
    #allocation8 [shape = 'u8[65536]{0}', space=vmem, size = 0x10000, scoped, tag = 'input window, operand 3, single buffered']
    #allocation9 [shape = 's32[1]{0}', space=sflag, size = 0x4, scoped, tag = 'scoped memory for tpu_custom_call.1']
    #allocation10 [shape = 'u8[65536]{0}', space=vmem, size = 0x10000, scoped, tag = 'input window, operand 4, single buffered']
    #allocation11 [shape = 'u8[65536]{0}', space=vmem, size = 0x10000, scoped, tag = 'input window, operand 5, single buffered']
    #allocation12 [shape = 's32[1]{0}', space=sflag, size = 0x4, scoped, tag = 'scoped memory for tpu_custom_call.1']
    #allocation13 [shape = 'u8[131072]{0}', space=vmem, size = 0x20000, scoped, tag = 'output window, operand 0, single buffered']
    #allocation14 [shape = 'u8[131072]{0}', space=vmem, size = 0x20000, scoped, tag = 'output window, operand 1, single buffered']
    #allocation15 [shape = 's32[1]{0}', space=sflag, size = 0x4, scoped, tag = 'scoped memory for tpu_custom_call.1']
    #allocation16 [shape = 'u8[131072]{0}', space=vmem, size = 0x20000, scoped, tag = 'output window, operand 2, single buffered']
    %14 = vsyncpa [#allocation3], 0
    %15 = vsyncpa [#allocation6], 0
    %16 = vsyncpa [#allocation9], 0
    %17 = vsyncpa [#allocation12], 0
    %18 = vsyncpa [#allocation4], 0
    %19 = vsyncpa [#allocation15], 0
    // Predicated region
    $region2: #{tpu_custom_call.1} parent=1 // pred_check
      _
    $region3: #{tpu_custom_call.1} parent=1 // pred_check_branch
      %21 = sbr.rel (0) target = $region5
    $region4: #{tpu_custom_call.1} parent=1 // pred_region
      %s23 = ssub.s32 4096, 4096
      %24 = vsyncadd [#allocation3], %s23
      %s25 = sshll.u32 [#allocation2], 4
      %s26 = int_to_ptr.vmem [resolvable:$true] %s25
      %31 = dma.hbm_to_vmem [thread:$0]  %s0, 4096, %s26, [#allocation3], 128, 128, 8
    $region5: #{tpu_custom_call.1} parent=1 // pred_fallthru
      _
    // Predicated region
    $region6: #{tpu_custom_call.1} parent=1 // pred_check
      _
    $region7: #{tpu_custom_call.1} parent=1 // pred_check_branch
      %33 = sbr.rel (0) target = $region9
    $region8: #{tpu_custom_call.1} parent=1 // pred_region
      %s35 = ssub.s32 4096, 4096
      %36 = vsyncadd [#allocation6], %s35
      %s37 = sshll.u32 [#allocation5], 4
      %s38 = int_to_ptr.vmem [resolvable:$true] %s37
      %43 = dma.hbm_to_vmem [thread:$0]  %s1, 4096, %s38, [#allocation6], 128, 128, 8
    $region9: #{tpu_custom_call.1} parent=1 // pred_fallthru
      _
    // Predicated region
    $region10: #{tpu_custom_call.1} parent=1 // pred_check
      _
    $region11: #{tpu_custom_call.1} parent=1 // pred_check_branch
      %45 = sbr.rel (0) target = $region13
    $region12: #{tpu_custom_call.1} parent=1 // pred_region
      %s47 = ssub.s32 4096, 4096
      %48 = vsyncadd [#allocation6], %s47
      %s49 = sshll.u32 [#allocation7], 4
      %s50 = int_to_ptr.vmem [resolvable:$true] %s49
      %55 = dma.hbm_to_vmem [thread:$0]  %s2, 4096, %s50, [#allocation6], 128, 128, 8
    $region13: #{tpu_custom_call.1} parent=1 // pred_fallthru
      _
    // Predicated region
    $region14: #{tpu_custom_call.1} parent=1 // pred_check
      _
    $region15: #{tpu_custom_call.1} parent=1 // pred_check_branch
      %57 = sbr.rel (0) target = $region17
    $region16: #{tpu_custom_call.1} parent=1 // pred_region
      %s59 = ssub.s32 2048, 2048
      %60 = vsyncadd [#allocation9], %s59
      %s61 = sshll.u32 [#allocation8], 4
      %s62 = int_to_ptr.vmem [resolvable:$true] %s61
      %67 = dma.hbm_to_vmem [thread:$0]  %s3, 2048, %s62, [#allocation9], 128, 128, 8
    $region17: #{tpu_custom_call.1} parent=1 // pred_fallthru
      _
    // Predicated region
    $region18: #{tpu_custom_call.1} parent=1 // pred_check
      _
    $region19: #{tpu_custom_call.1} parent=1 // pred_check_branch
      %69 = sbr.rel (0) target = $region21
    $region20: #{tpu_custom_call.1} parent=1 // pred_region
      %s71 = ssub.s32 2048, 2048
      %72 = vsyncadd [#allocation9], %s71
      %s73 = sshll.u32 [#allocation10], 4
      %s74 = int_to_ptr.vmem [resolvable:$true] %s73
      %79 = dma.hbm_to_vmem [thread:$0]  %s4, 2048, %s74, [#allocation9], 128, 128, 8
    $region21: #{tpu_custom_call.1} parent=1 // pred_fallthru
      _
    // Predicated region
    $region22: #{tpu_custom_call.1} parent=1 // pred_check
      _
    $region23: #{tpu_custom_call.1} parent=1 // pred_check_branch
      %81 = sbr.rel (0) target = $region25
    $region24: #{tpu_custom_call.1} parent=1 // pred_region
      %s83 = ssub.s32 2048, 2048
      %84 = vsyncadd [#allocation12], %s83
      %s85 = sshll.u32 [#allocation11], 4
      %s86 = int_to_ptr.vmem [resolvable:$true] %s85
      %91 = dma.hbm_to_vmem [thread:$0]  %s5, 2048, %s86, [#allocation12], 128, 128, 8
    $region25: #{tpu_custom_call.1} parent=1 // pred_fallthru
      _
    // Predicated region
    $region26: #{tpu_custom_call.1} parent=1 // pred_check
      _
    $region27: #{tpu_custom_call.1} parent=1 // pred_check_branch
      %93 = sbr.rel (0) target = $region29
    $region28: #{tpu_custom_call.1} parent=1 // pred_region
      %94 = dma.done [#allocation3], 4096
    $region29: #{tpu_custom_call.1} parent=1 // pred_fallthru
      _
    // Predicated region
    $region30: #{tpu_custom_call.1} parent=1 // pred_check
      _
    $region31: #{tpu_custom_call.1} parent=1 // pred_check_branch
      %96 = sbr.rel (0) target = $region33
    $region32: #{tpu_custom_call.1} parent=1 // pred_region
      %97 = dma.done [#allocation6], 4096
    $region33: #{tpu_custom_call.1} parent=1 // pred_fallthru
      _
    // Predicated region
    $region34: #{tpu_custom_call.1} parent=1 // pred_check
      _
    $region35: #{tpu_custom_call.1} parent=1 // pred_check_branch
      %99 = sbr.rel (0) target = $region37
    $region36: #{tpu_custom_call.1} parent=1 // pred_region
      %100 = dma.done [#allocation6], 4096
    $region37: #{tpu_custom_call.1} parent=1 // pred_fallthru
      _
    // Predicated region
    $region38: #{tpu_custom_call.1} parent=1 // pred_check
      _
    $region39: #{tpu_custom_call.1} parent=1 // pred_check_branch
      %102 = sbr.rel (0) target = $region41
    $region40: #{tpu_custom_call.1} parent=1 // pred_region
      %103 = dma.done [#allocation9], 2048
    $region41: #{tpu_custom_call.1} parent=1 // pred_fallthru
      _
    // Predicated region
    $region42: #{tpu_custom_call.1} parent=1 // pred_check
      _
    $region43: #{tpu_custom_call.1} parent=1 // pred_check_branch
      %105 = sbr.rel (0) target = $region45
    $region44: #{tpu_custom_call.1} parent=1 // pred_region
      %106 = dma.done [#allocation9], 2048
    $region45: #{tpu_custom_call.1} parent=1 // pred_fallthru
      _
    // Predicated region
    $region46: #{tpu_custom_call.1} parent=1 // pred_check
      _
    $region47: #{tpu_custom_call.1} parent=1 // pred_check_branch
      %108 = sbr.rel (0) target = $region49
    $region48: #{tpu_custom_call.1} parent=1 // pred_region
      %109 = dma.done [#allocation12], 2048
    $region49: #{tpu_custom_call.1} parent=1 // pred_fallthru
      _
    %v110 = vld [vmem:[#allocation2] sm:$0xff]
    %v111 = vld [vmem:[#allocation2 + $0x8] sm:$0xff]
    %v112 = vld [vmem:[#allocation2 + $0x10] sm:$0xff]
    %v113 = vld [vmem:[#allocation2 + $0x18] sm:$0xff]
    %v114 = vld [vmem:[#allocation2 + $0x20] sm:$0xff]
    %v115 = vld [vmem:[#allocation2 + $0x28] sm:$0xff]
    %v116 = vld [vmem:[#allocation2 + $0x30] sm:$0xff]
    %v117 = vld [vmem:[#allocation2 + $0x38] sm:$0xff]
    %v118 = vld [vmem:[#allocation2 + $0x40] sm:$0xff]
    %v119 = vld [vmem:[#allocation2 + $0x48] sm:$0xff]
    %v120 = vld [vmem:[#allocation2 + $0x50] sm:$0xff]
    %v121 = vld [vmem:[#allocation2 + $0x58] sm:$0xff]
    %v122 = vld [vmem:[#allocation2 + $0x60] sm:$0xff]
    %v123 = vld [vmem:[#allocation2 + $0x68] sm:$0xff]
    %v124 = vld [vmem:[#allocation2 + $0x70] sm:$0xff]
    %v125 = vld [vmem:[#allocation2 + $0x78] sm:$0xff]
    %v126 = vld [vmem:[#allocation2 + $0x80] sm:$0xff]
    %v127 = vld [vmem:[#allocation2 + $0x88] sm:$0xff]
    %v128 = vld [vmem:[#allocation2 + $0x90] sm:$0xff]
    %v129 = vld [vmem:[#allocation2 + $0x98] sm:$0xff]
    %v130 = vld [vmem:[#allocation2 + $0xa0] sm:$0xff]
    %v131 = vld [vmem:[#allocation2 + $0xa8] sm:$0xff]
    %v132 = vld [vmem:[#allocation2 + $0xb0] sm:$0xff]
    %v133 = vld [vmem:[#allocation2 + $0xb8] sm:$0xff]
    %v134 = vld [vmem:[#allocation2 + $0xc0] sm:$0xff]
    %v135 = vld [vmem:[#allocation2 + $0xc8] sm:$0xff]
    %v136 = vld [vmem:[#allocation2 + $0xd0] sm:$0xff]
    %v137 = vld [vmem:[#allocation2 + $0xd8] sm:$0xff]
    %v138 = vld [vmem:[#allocation2 + $0xe0] sm:$0xff]
    %v139 = vld [vmem:[#allocation2 + $0xe8] sm:$0xff]
    %v140 = vld [vmem:[#allocation2 + $0xf0] sm:$0xff]
    %v141 = vld [vmem:[#allocation2 + $0xf8] sm:$0xff]
    %v142 = vld [vmem:[#allocation8] sm:$0xff]
    %v143 = vld [vmem:[#allocation8 + $0x8] sm:$0xff]
    %v144 = vld [vmem:[#allocation8 + $0x10] sm:$0xff]
    %v145 = vld [vmem:[#allocation8 + $0x18] sm:$0xff]
    %v146 = vld [vmem:[#allocation8 + $0x20] sm:$0xff]
    %v147 = vld [vmem:[#allocation8 + $0x28] sm:$0xff]
    %v148 = vld [vmem:[#allocation8 + $0x30] sm:$0xff]
    %v149 = vld [vmem:[#allocation8 + $0x38] sm:$0xff]
    %v150 = vld [vmem:[#allocation8 + $0x40] sm:$0xff]
    %v151 = vld [vmem:[#allocation8 + $0x48] sm:$0xff]
    %v152 = vld [vmem:[#allocation8 + $0x50] sm:$0xff]
    %v153 = vld [vmem:[#allocation8 + $0x58] sm:$0xff]
    %v154 = vld [vmem:[#allocation8 + $0x60] sm:$0xff]
    %v155 = vld [vmem:[#allocation8 + $0x68] sm:$0xff]
    %v156 = vld [vmem:[#allocation8 + $0x70] sm:$0xff]
    %v157 = vld [vmem:[#allocation8 + $0x78] sm:$0xff]
    %158 = vmatprep.subr.mxu0 0.0
    %159 = vmatpush1.msra.mxu0 %v142
    %160 = vmatprep.subr.mxu0 0.0
    %161 = vmatpush1.msra.mxu0 %v143
    %162 = vmatprep.subr.mxu0 0.0
    %163 = vmatpush1.msra.mxu0 %v144
    %164 = vmatprep.subr.mxu0 0.0
    %165 = vmatpush1.msra.mxu0 %v145
    %166 = vmatprep.subr.mxu0 0.0
    %167 = vmatpush1.msra.mxu0 %v146
    %168 = vmatprep.subr.mxu0 0.0
    %169 = vmatpush1.msra.mxu0 %v147
    %170 = vmatprep.subr.mxu0 0.0
    %171 = vmatpush1.msra.mxu0 %v148
    %172 = vmatprep.subr.mxu0 0.0
    %173 = vmatpush1.msra.mxu0 %v149
    %174 = vmatprep.subr.mxu0 0.0
    %175 = vmatpush1.msra.mxu0 %v150
    %176 = vmatprep.subr.mxu0 0.0
    %177 = vmatpush1.msra.mxu0 %v151
    %178 = vmatprep.subr.mxu0 0.0
    %179 = vmatpush1.msra.mxu0 %v152
    %180 = vmatprep.subr.mxu0 0.0
    %181 = vmatpush1.msra.mxu0 %v153
    %182 = vmatprep.subr.mxu0 0.0
    %183 = vmatpush1.msra.mxu0 %v154
    %184 = vmatprep.subr.mxu0 0.0
    %185 = vmatpush1.msra.mxu0 %v155
    %186 = vmatprep.subr.mxu0 0.0
    %187 = vmatpush1.msra.mxu0 %v156
    %188 = vmatprep.subr.mxu0 0.0
    %189 = vmatpush1.msra.mxu0 %v157
    %190 = vmatprep.subr.mxu0 0.0
    %191 = vmatpush1.msra.mxu0 0.0
    %192 = vmatprep.subr.mxu0 0.0
    %193 = vmatpush1.msra.mxu0 0.0
    %194 = vmatprep.subr.mxu0 0.0
    %195 = vmatpush1.msra.mxu0 0.0
    %196 = vmatprep.subr.mxu0 0.0
    %197 = vmatpush1.msra.mxu0 0.0
    %198 = vmatprep.subr.mxu0 0.0
    %199 = vmatpush1.msra.mxu0 0.0
    %200 = vmatprep.subr.mxu0 0.0
    %201 = vmatpush1.msra.mxu0 0.0
    %202 = vmatprep.subr.mxu0 0.0
    %203 = vmatpush1.msra.mxu0 0.0
    %204 = vmatprep.subr.mxu0 0.0
    %205 = vmatpush1.msra.mxu0 0.0
    %206 = vmatprep.subr.mxu0 0.0
    %207 = vmatpush1.msra.mxu0 0.0
    %208 = vmatprep.subr.mxu0 0.0
    %209 = vmatpush1.msra.mxu0 0.0
    %210 = vmatprep.subr.mxu0 0.0
    %211 = vmatpush1.msra.mxu0 0.0
    %212 = vmatprep.subr.mxu0 0.0
    %213 = vmatpush1.msra.mxu0 0.0
    %214 = vmatprep.subr.mxu0 0.0
    %215 = vmatpush1.msra.mxu0 0.0
    %216 = vmatprep.subr.mxu0 0.0
    %217 = vmatpush1.msra.mxu0 0.0
    %218 = vmatprep.subr.mxu0 0.0
    %219 = vmatpush1.msra.mxu0 0.0
    %220 = vmatprep.subr.mxu0 0.0
    %221 = vmatpush1.msra.mxu0 0.0
    %222 = vmatprep.mubr.f32.mxu0 0.0
    %223 = vmatmul.mubr.f32.gmra.mrb[0].mxu0 %v110
    %v224 = vpop.f32.mrb[0].mxu0
    %v225 = vadd.f32 0.0, %v224
    %v226 = vpop.f32.mrb[0].mxu0
    %227 = vmatprep.mubr.f32.mxu0 0.0
    %228 = vmatmul.mubr.f32.gmra.mrb[0].mxu0 %v111
    %v229 = vpop.f32.mrb[0].mxu0
    %v230 = vadd.f32 0.0, %v229
    %v231 = vpop.f32.mrb[0].mxu0
    %232 = vmatprep.mubr.f32.mxu0 0.0
    %233 = vmatmul.mubr.f32.gmra.mrb[0].mxu0 %v112
    %v234 = vpop.f32.mrb[0].mxu0
    %v235 = vadd.f32 0.0, %v234
    %v236 = vpop.f32.mrb[0].mxu0
    %237 = vmatprep.mubr.f32.mxu0 0.0
    %238 = vmatmul.mubr.f32.gmra.mrb[0].mxu0 %v113
    %v239 = vpop.f32.mrb[0].mxu0
    %v240 = vadd.f32 0.0, %v239
    %v241 = vpop.f32.mrb[0].mxu0
    %242 = vmatprep.mubr.f32.mxu0 0.0
    %243 = vmatmul.mubr.f32.gmra.mrb[0].mxu0 %v114
    %v244 = vpop.f32.mrb[0].mxu0
    %v245 = vadd.f32 0.0, %v244
    %v246 = vpop.f32.mrb[0].mxu0
    %247 = vmatprep.mubr.f32.mxu0 0.0
    %248 = vmatmul.mubr.f32.gmra.mrb[0].mxu0 %v115
    %v249 = vpop.f32.mrb[0].mxu0
    %v250 = vadd.f32 0.0, %v249
    %v251 = vpop.f32.mrb[0].mxu0
    %252 = vmatprep.mubr.f32.mxu0 0.0
    %253 = vmatmul.mubr.f32.gmra.mrb[0].mxu0 %v116
    %v254 = vpop.f32.mrb[0].mxu0
    %v255 = vadd.f32 0.0, %v254
    %v256 = vpop.f32.mrb[0].mxu0
    %257 = vmatprep.mubr.f32.mxu0 0.0
    %258 = vmatmul.mubr.f32.gmra.mrb[0].mxu0 %v117
    %v259 = vpop.f32.mrb[0].mxu0
    %v260 = vadd.f32 0.0, %v259
    %v261 = vpop.f32.mrb[0].mxu0
    %262 = vmatprep.mubr.f32.mxu0 0.0
    %263 = vmatmul.mubr.f32.gmra.mrb[0].mxu0 %v118
    %v264 = vpop.f32.mrb[0].mxu0
    %v265 = vadd.f32 0.0, %v264
    %v266 = vpop.f32.mrb[0].mxu0
    %267 = vmatprep.mubr.f32.mxu0 0.0
    %268 = vmatmul.mubr.f32.gmra.mrb[0].mxu0 %v119
    %v269 = vpop.f32.mrb[0].mxu0
    %v270 = vadd.f32 0.0, %v269
    %v271 = vpop.f32.mrb[0].mxu0
    %272 = vmatprep.mubr.f32.mxu0 0.0
    %273 = vmatmul.mubr.f32.gmra.mrb[0].mxu0 %v120
    %v274 = vpop.f32.mrb[0].mxu0
    %v275 = vadd.f32 0.0, %v274
    %v276 = vpop.f32.mrb[0].mxu0
    %277 = vmatprep.mubr.f32.mxu0 0.0
    %278 = vmatmul.mubr.f32.gmra.mrb[0].mxu0 %v121
    %v279 = vpop.f32.mrb[0].mxu0
    %v280 = vadd.f32 0.0, %v279
    %v281 = vpop.f32.mrb[0].mxu0
    %282 = vmatprep.mubr.f32.mxu0 0.0
    %283 = vmatmul.mubr.f32.gmra.mrb[0].mxu0 %v122
    %v284 = vpop.f32.mrb[0].mxu0
    %v285 = vadd.f32 0.0, %v284
    %v286 = vpop.f32.mrb[0].mxu0
    %287 = vmatprep.mubr.f32.mxu0 0.0
    %288 = vmatmul.mubr.f32.gmra.mrb[0].mxu0 %v123
    %v289 = vpop.f32.mrb[0].mxu0
    %v290 = vadd.f32 0.0, %v289
    %v291 = vpop.f32.mrb[0].mxu0
    %292 = vmatprep.mubr.f32.mxu0 0.0
    %293 = vmatmul.mubr.f32.gmra.mrb[0].mxu0 %v124
    %v294 = vpop.f32.mrb[0].mxu0
    %v295 = vadd.f32 0.0, %v294
    %v296 = vpop.f32.mrb[0].mxu0
    %297 = vmatprep.mubr.f32.mxu0 0.0
    %298 = vmatmul.mubr.f32.gmra.mrb[0].mxu0 %v125
    %v299 = vpop.f32.mrb[0].mxu0
    %v300 = vadd.f32 0.0, %v299
    %v301 = vpop.f32.mrb[0].mxu0
    %302 = vmatprep.mubr.f32.mxu0 0.0
    %303 = vmatmul.mubr.f32.gmra.mrb[0].mxu0 %v126
    %v304 = vpop.f32.mrb[0].mxu0
    %v305 = vadd.f32 0.0, %v304
    %v306 = vpop.f32.mrb[0].mxu0
    %307 = vmatprep.mubr.f32.mxu0 0.0
    %308 = vmatmul.mubr.f32.gmra.mrb[0].mxu0 %v127
    %v309 = vpop.f32.mrb[0].mxu0
    %v310 = vadd.f32 0.0, %v309
    %v311 = vpop.f32.mrb[0].mxu0
    %312 = vmatprep.mubr.f32.mxu0 0.0
    %313 = vmatmul.mubr.f32.gmra.mrb[0].mxu0 %v128
    %v314 = vpop.f32.mrb[0].mxu0
    %v315 = vadd.f32 0.0, %v314
    %v316 = vpop.f32.mrb[0].mxu0
    %317 = vmatprep.mubr.f32.mxu0 0.0
    %318 = vmatmul.mubr.f32.gmra.mrb[0].mxu0 %v129
    %v319 = vpop.f32.mrb[0].mxu0
    %v320 = vadd.f32 0.0, %v319
    %v321 = vpop.f32.mrb[0].mxu0
    %322 = vmatprep.mubr.f32.mxu0 0.0
    %323 = vmatmul.mubr.f32.gmra.mrb[0].mxu0 %v130
    %v324 = vpop.f32.mrb[0].mxu0
    %v325 = vadd.f32 0.0, %v324
    %v326 = vpop.f32.mrb[0].mxu0
    %327 = vmatprep.mubr.f32.mxu0 0.0
    %328 = vmatmul.mubr.f32.gmra.mrb[0].mxu0 %v131
    %v329 = vpop.f32.mrb[0].mxu0
    %v330 = vadd.f32 0.0, %v329
    %v331 = vpop.f32.mrb[0].mxu0
    %332 = vmatprep.mubr.f32.mxu0 0.0
    %333 = vmatmul.mubr.f32.gmra.mrb[0].mxu0 %v132
    %v334 = vpop.f32.mrb[0].mxu0
    %v335 = vadd.f32 0.0, %v334
    %v336 = vpop.f32.mrb[0].mxu0
    %337 = vmatprep.mubr.f32.mxu0 0.0
    %338 = vmatmul.mubr.f32.gmra.mrb[0].mxu0 %v133
    %v339 = vpop.f32.mrb[0].mxu0
    %v340 = vadd.f32 0.0, %v339
    %v341 = vpop.f32.mrb[0].mxu0
    %342 = vmatprep.mubr.f32.mxu0 0.0
    %343 = vmatmul.mubr.f32.gmra.mrb[0].mxu0 %v134
    %v344 = vpop.f32.mrb[0].mxu0
    %v345 = vadd.f32 0.0, %v344
    %v346 = vpop.f32.mrb[0].mxu0
    %347 = vmatprep.mubr.f32.mxu0 0.0
    %348 = vmatmul.mubr.f32.gmra.mrb[0].mxu0 %v135
    %v349 = vpop.f32.mrb[0].mxu0
    %v350 = vadd.f32 0.0, %v349
    %v351 = vpop.f32.mrb[0].mxu0
    %352 = vmatprep.mubr.f32.mxu0 0.0
    %353 = vmatmul.mubr.f32.gmra.mrb[0].mxu0 %v136
    %v354 = vpop.f32.mrb[0].mxu0
    %v355 = vadd.f32 0.0, %v354
    %v356 = vpop.f32.mrb[0].mxu0
    %357 = vmatprep.mubr.f32.mxu0 0.0
    %358 = vmatmul.mubr.f32.gmra.mrb[0].mxu0 %v137
    %v359 = vpop.f32.mrb[0].mxu0
    %v360 = vadd.f32 0.0, %v359
    %v361 = vpop.f32.mrb[0].mxu0
    %362 = vmatprep.mubr.f32.mxu0 0.0
    %363 = vmatmul.mubr.f32.gmra.mrb[0].mxu0 %v138
    %v364 = vpop.f32.mrb[0].mxu0
    %v365 = vadd.f32 0.0, %v364
    %v366 = vpop.f32.mrb[0].mxu0
    %367 = vmatprep.mubr.f32.mxu0 0.0
    %368 = vmatmul.mubr.f32.gmra.mrb[0].mxu0 %v139
    %v369 = vpop.f32.mrb[0].mxu0
    %v370 = vadd.f32 0.0, %v369
    %v371 = vpop.f32.mrb[0].mxu0
    %372 = vmatprep.mubr.f32.mxu0 0.0
    %373 = vmatmul.mubr.f32.gmra.mrb[0].mxu0 %v140
    %v374 = vpop.f32.mrb[0].mxu0
    %v375 = vadd.f32 0.0, %v374
    %v376 = vpop.f32.mrb[0].mxu0
    %377 = vmatprep.mubr.f32.mxu0 0.0
    %378 = vmatmul.mubr.f32.gmra.mrb[0].mxu0 %v141
    %v379 = vpop.f32.mrb[0].mxu0
    %v380 = vadd.f32 0.0, %v379
    %v381 = vpop.f32.mrb[0].mxu0
    %382 = vdwg.mxu0
    %383 = vst [vmem:[#allocation13] sm:$0xff] %v225
    %384 = vst [vmem:[#allocation13 + $0x8] sm:$0xff] %v230
    %385 = vst [vmem:[#allocation13 + $0x10] sm:$0xff] %v235
    %386 = vst [vmem:[#allocation13 + $0x18] sm:$0xff] %v240
    %387 = vst [vmem:[#allocation13 + $0x20] sm:$0xff] %v245
    %388 = vst [vmem:[#allocation13 + $0x28] sm:$0xff] %v250
    %389 = vst [vmem:[#allocation13 + $0x30] sm:$0xff] %v255
    %390 = vst [vmem:[#allocation13 + $0x38] sm:$0xff] %v260
    %391 = vst [vmem:[#allocation13 + $0x40] sm:$0xff] %v265
    %392 = vst [vmem:[#allocation13 + $0x48] sm:$0xff] %v270
    %393 = vst [vmem:[#allocation13 + $0x50] sm:$0xff] %v275
    %394 = vst [vmem:[#allocation13 + $0x58] sm:$0xff] %v280
    %395 = vst [vmem:[#allocation13 + $0x60] sm:$0xff] %v285
    %396 = vst [vmem:[#allocation13 + $0x68] sm:$0xff] %v290
    %397 = vst [vmem:[#allocation13 + $0x70] sm:$0xff] %v295
    %398 = vst [vmem:[#allocation13 + $0x78] sm:$0xff] %v300
    %399 = vst [vmem:[#allocation13 + $0x80] sm:$0xff] %v305
    %400 = vst [vmem:[#allocation13 + $0x88] sm:$0xff] %v310
    %401 = vst [vmem:[#allocation13 + $0x90] sm:$0xff] %v315
    %402 = vst [vmem:[#allocation13 + $0x98] sm:$0xff] %v320
    %403 = vst [vmem:[#allocation13 + $0xa0] sm:$0xff] %v325
    %404 = vst [vmem:[#allocation13 + $0xa8] sm:$0xff] %v330
    %405 = vst [vmem:[#allocation13 + $0xb0] sm:$0xff] %v335
    %406 = vst [vmem:[#allocation13 + $0xb8] sm:$0xff] %v340
    %407 = vst [vmem:[#allocation13 + $0xc0] sm:$0xff] %v345
    %408 = vst [vmem:[#allocation13 + $0xc8] sm:$0xff] %v350
    %409 = vst [vmem:[#allocation13 + $0xd0] sm:$0xff] %v355
    %410 = vst [vmem:[#allocation13 + $0xd8] sm:$0xff] %v360
    %411 = vst [vmem:[#allocation13 + $0xe0] sm:$0xff] %v365
    %412 = vst [vmem:[#allocation13 + $0xe8] sm:$0xff] %v370
    %413 = vst [vmem:[#allocation13 + $0xf0] sm:$0xff] %v375
    %414 = vst [vmem:[#allocation13 + $0xf8] sm:$0xff] %v380
    %v415 = vld [vmem:[#allocation5] sm:$0xff]
    %v416 = vld [vmem:[#allocation5 + $0x8] sm:$0xff]
    %v417 = vld [vmem:[#allocation5 + $0x10] sm:$0xff]
    %v418 = vld [vmem:[#allocation5 + $0x18] sm:$0xff]
    %v419 = vld [vmem:[#allocation5 + $0x20] sm:$0xff]
    %v420 = vld [vmem:[#allocation5 + $0x28] sm:$0xff]
    %v421 = vld [vmem:[#allocation5 + $0x30] sm:$0xff]
    %v422 = vld [vmem:[#allocation5 + $0x38] sm:$0xff]
    %v423 = vld [vmem:[#allocation5 + $0x40] sm:$0xff]
    %v424 = vld [vmem:[#allocation5 + $0x48] sm:$0xff]
    %v425 = vld [vmem:[#allocation5 + $0x50] sm:$0xff]
    %v426 = vld [vmem:[#allocation5 + $0x58] sm:$0xff]
    %v427 = vld [vmem:[#allocation5 + $0x60] sm:$0xff]
    %v428 = vld [vmem:[#allocation5 + $0x68] sm:$0xff]
    %v429 = vld [vmem:[#allocation5 + $0x70] sm:$0xff]
    %v430 = vld [vmem:[#allocation5 + $0x78] sm:$0xff]
    %v431 = vld [vmem:[#allocation5 + $0x80] sm:$0xff]
    %v432 = vld [vmem:[#allocation5 + $0x88] sm:$0xff]
    %v433 = vld [vmem:[#allocation5 + $0x90] sm:$0xff]
    %v434 = vld [vmem:[#allocation5 + $0x98] sm:$0xff]
    %v435 = vld [vmem:[#allocation5 + $0xa0] sm:$0xff]
    %v436 = vld [vmem:[#allocation5 + $0xa8] sm:$0xff]
    %v437 = vld [vmem:[#allocation5 + $0xb0] sm:$0xff]
    %v438 = vld [vmem:[#allocation5 + $0xb8] sm:$0xff]
    %v439 = vld [vmem:[#allocation5 + $0xc0] sm:$0xff]
    %v440 = vld [vmem:[#allocation5 + $0xc8] sm:$0xff]
    %v441 = vld [vmem:[#allocation5 + $0xd0] sm:$0xff]
    %v442 = vld [vmem:[#allocation5 + $0xd8] sm:$0xff]
    %v443 = vld [vmem:[#allocation5 + $0xe0] sm:$0xff]
    %v444 = vld [vmem:[#allocation5 + $0xe8] sm:$0xff]
    %v445 = vld [vmem:[#allocation5 + $0xf0] sm:$0xff]
    %v446 = vld [vmem:[#allocation5 + $0xf8] sm:$0xff]
    %v447 = vld [vmem:[#allocation10] sm:$0xff]
    %v448 = vld [vmem:[#allocation10 + $0x8] sm:$0xff]
    %v449 = vld [vmem:[#allocation10 + $0x10] sm:$0xff]
    %v450 = vld [vmem:[#allocation10 + $0x18] sm:$0xff]
    %v451 = vld [vmem:[#allocation10 + $0x20] sm:$0xff]
    %v452 = vld [vmem:[#allocation10 + $0x28] sm:$0xff]
    %v453 = vld [vmem:[#allocation10 + $0x30] sm:$0xff]
    %v454 = vld [vmem:[#allocation10 + $0x38] sm:$0xff]
    %v455 = vld [vmem:[#allocation10 + $0x40] sm:$0xff]
    %v456 = vld [vmem:[#allocation10 + $0x48] sm:$0xff]
    %v457 = vld [vmem:[#allocation10 + $0x50] sm:$0xff]
    %v458 = vld [vmem:[#allocation10 + $0x58] sm:$0xff]
    %v459 = vld [vmem:[#allocation10 + $0x60] sm:$0xff]
    %v460 = vld [vmem:[#allocation10 + $0x68] sm:$0xff]
    %v461 = vld [vmem:[#allocation10 + $0x70] sm:$0xff]
    %v462 = vld [vmem:[#allocation10 + $0x78] sm:$0xff]
    %463 = vmatprep.subr.mxu0 0.0
    %464 = vmatpush1.msra.mxu0 %v447
    %465 = vmatprep.subr.mxu0 0.0
    %466 = vmatpush1.msra.mxu0 %v448
    %467 = vmatprep.subr.mxu0 0.0
    %468 = vmatpush1.msra.mxu0 %v449
    %469 = vmatprep.subr.mxu0 0.0
    %470 = vmatpush1.msra.mxu0 %v450
    %471 = vmatprep.subr.mxu0 0.0
    %472 = vmatpush1.msra.mxu0 %v451
    %473 = vmatprep.subr.mxu0 0.0
    %474 = vmatpush1.msra.mxu0 %v452
    %475 = vmatprep.subr.mxu0 0.0
    %476 = vmatpush1.msra.mxu0 %v453
    %477 = vmatprep.subr.mxu0 0.0
    %478 = vmatpush1.msra.mxu0 %v454
    %479 = vmatprep.subr.mxu0 0.0
    %480 = vmatpush1.msra.mxu0 %v455
    %481 = vmatprep.subr.mxu0 0.0
    %482 = vmatpush1.msra.mxu0 %v456
    %483 = vmatprep.subr.mxu0 0.0
    %484 = vmatpush1.msra.mxu0 %v457
    %485 = vmatprep.subr.mxu0 0.0
    %486 = vmatpush1.msra.mxu0 %v458
    %487 = vmatprep.subr.mxu0 0.0
    %488 = vmatpush1.msra.mxu0 %v459
    %489 = vmatprep.subr.mxu0 0.0
    %490 = vmatpush1.msra.mxu0 %v460
    %491 = vmatprep.subr.mxu0 0.0
    %492 = vmatpush1.msra.mxu0 %v461
    %493 = vmatprep.subr.mxu0 0.0
    %494 = vmatpush1.msra.mxu0 %v462
    %495 = vmatprep.subr.mxu0 0.0
    %496 = vmatpush1.msra.mxu0 0.0
    %497 = vmatprep.subr.mxu0 0.0
    %498 = vmatpush1.msra.mxu0 0.0
    %499 = vmatprep.subr.mxu0 0.0
    %500 = vmatpush1.msra.mxu0 0.0
    %501 = vmatprep.subr.mxu0 0.0
    %502 = vmatpush1.msra.mxu0 0.0
    %503 = vmatprep.subr.mxu0 0.0
    %504 = vmatpush1.msra.mxu0 0.0
    %505 = vmatprep.subr.mxu0 0.0
    %506 = vmatpush1.msra.mxu0 0.0
    %507 = vmatprep.subr.mxu0 0.0
    %508 = vmatpush1.msra.mxu0 0.0
    %509 = vmatprep.subr.mxu0 0.0
    %510 = vmatpush1.msra.mxu0 0.0
    %511 = vmatprep.subr.mxu0 0.0
    %512 = vmatpush1.msra.mxu0 0.0
    %513 = vmatprep.subr.mxu0 0.0
    %514 = vmatpush1.msra.mxu0 0.0
    %515 = vmatprep.subr.mxu0 0.0
    %516 = vmatpush1.msra.mxu0 0.0
    %517 = vmatprep.subr.mxu0 0.0
    %518 = vmatpush1.msra.mxu0 0.0
    %519 = vmatprep.subr.mxu0 0.0
    %520 = vmatpush1.msra.mxu0 0.0
    %521 = vmatprep.subr.mxu0 0.0
    %522 = vmatpush1.msra.mxu0 0.0
    %523 = vmatprep.subr.mxu0 0.0
    %524 = vmatpush1.msra.mxu0 0.0
    %525 = vmatprep.subr.mxu0 0.0
    %526 = vmatpush1.msra.mxu0 0.0
    %527 = vmatprep.mubr.f32.mxu0 0.0
    %528 = vmatmul.mubr.f32.gmra.mrb[0].mxu0 %v415
    %v529 = vpop.f32.mrb[0].mxu0
    %v530 = vadd.f32 0.0, %v529
    %v531 = vpop.f32.mrb[0].mxu0
    %532 = vmatprep.mubr.f32.mxu0 0.0
    %533 = vmatmul.mubr.f32.gmra.mrb[0].mxu0 %v416
    %v534 = vpop.f32.mrb[0].mxu0
    %v535 = vadd.f32 0.0, %v534
    %v536 = vpop.f32.mrb[0].mxu0
    %537 = vmatprep.mubr.f32.mxu0 0.0
    %538 = vmatmul.mubr.f32.gmra.mrb[0].mxu0 %v417
    %v539 = vpop.f32.mrb[0].mxu0
    %v540 = vadd.f32 0.0, %v539
    %v541 = vpop.f32.mrb[0].mxu0
    %542 = vmatprep.mubr.f32.mxu0 0.0
    %543 = vmatmul.mubr.f32.gmra.mrb[0].mxu0 %v418
    %v544 = vpop.f32.mrb[0].mxu0
    %v545 = vadd.f32 0.0, %v544
    %v546 = vpop.f32.mrb[0].mxu0
    %547 = vmatprep.mubr.f32.mxu0 0.0
    %548 = vmatmul.mubr.f32.gmra.mrb[0].mxu0 %v419
    %v549 = vpop.f32.mrb[0].mxu0
    %v550 = vadd.f32 0.0, %v549
    %v551 = vpop.f32.mrb[0].mxu0
    %552 = vmatprep.mubr.f32.mxu0 0.0
    %553 = vmatmul.mubr.f32.gmra.mrb[0].mxu0 %v420
    %v554 = vpop.f32.mrb[0].mxu0
    %v555 = vadd.f32 0.0, %v554
    %v556 = vpop.f32.mrb[0].mxu0
    %557 = vmatprep.mubr.f32.mxu0 0.0
    %558 = vmatmul.mubr.f32.gmra.mrb[0].mxu0 %v421
    %v559 = vpop.f32.mrb[0].mxu0
    %v560 = vadd.f32 0.0, %v559
    %v561 = vpop.f32.mrb[0].mxu0
    %562 = vmatprep.mubr.f32.mxu0 0.0
    %563 = vmatmul.mubr.f32.gmra.mrb[0].mxu0 %v422
    %v564 = vpop.f32.mrb[0].mxu0
    %v565 = vadd.f32 0.0, %v564
    %v566 = vpop.f32.mrb[0].mxu0
    %567 = vmatprep.mubr.f32.mxu0 0.0
    %568 = vmatmul.mubr.f32.gmra.mrb[0].mxu0 %v423
    %v569 = vpop.f32.mrb[0].mxu0
    %v570 = vadd.f32 0.0, %v569
    %v571 = vpop.f32.mrb[0].mxu0
    %572 = vmatprep.mubr.f32.mxu0 0.0
    %573 = vmatmul.mubr.f32.gmra.mrb[0].mxu0 %v424
    %v574 = vpop.f32.mrb[0].mxu0
    %v575 = vadd.f32 0.0, %v574
    %v576 = vpop.f32.mrb[0].mxu0
    %577 = vmatprep.mubr.f32.mxu0 0.0
    %578 = vmatmul.mubr.f32.gmra.mrb[0].mxu0 %v425
    %v579 = vpop.f32.mrb[0].mxu0
    %v580 = vadd.f32 0.0, %v579
    %v581 = vpop.f32.mrb[0].mxu0
    %582 = vmatprep.mubr.f32.mxu0 0.0
    %583 = vmatmul.mubr.f32.gmra.mrb[0].mxu0 %v426
    %v584 = vpop.f32.mrb[0].mxu0
    %v585 = vadd.f32 0.0, %v584
    %v586 = vpop.f32.mrb[0].mxu0
    %587 = vmatprep.mubr.f32.mxu0 0.0
    %588 = vmatmul.mubr.f32.gmra.mrb[0].mxu0 %v427
    %v589 = vpop.f32.mrb[0].mxu0
    %v590 = vadd.f32 0.0, %v589
    %v591 = vpop.f32.mrb[0].mxu0
    %592 = vmatprep.mubr.f32.mxu0 0.0
    %593 = vmatmul.mubr.f32.gmra.mrb[0].mxu0 %v428
    %v594 = vpop.f32.mrb[0].mxu0
    %v595 = vadd.f32 0.0, %v594
    %v596 = vpop.f32.mrb[0].mxu0
    %597 = vmatprep.mubr.f32.mxu0 0.0
    %598 = vmatmul.mubr.f32.gmra.mrb[0].mxu0 %v429
    %v599 = vpop.f32.mrb[0].mxu0
    %v600 = vadd.f32 0.0, %v599
    %v601 = vpop.f32.mrb[0].mxu0
    %602 = vmatprep.mubr.f32.mxu0 0.0
    %603 = vmatmul.mubr.f32.gmra.mrb[0].mxu0 %v430
    %v604 = vpop.f32.mrb[0].mxu0
    %v605 = vadd.f32 0.0, %v604
    %v606 = vpop.f32.mrb[0].mxu0
    %607 = vmatprep.mubr.f32.mxu0 0.0
    %608 = vmatmul.mubr.f32.gmra.mrb[0].mxu0 %v431
    %v609 = vpop.f32.mrb[0].mxu0
    %v610 = vadd.f32 0.0, %v609
    %v611 = vpop.f32.mrb[0].mxu0
    %612 = vmatprep.mubr.f32.mxu0 0.0
    %613 = vmatmul.mubr.f32.gmra.mrb[0].mxu0 %v432
    %v614 = vpop.f32.mrb[0].mxu0
    %v615 = vadd.f32 0.0, %v614
    %v616 = vpop.f32.mrb[0].mxu0
    %617 = vmatprep.mubr.f32.mxu0 0.0
    %618 = vmatmul.mubr.f32.gmra.mrb[0].mxu0 %v433
    %v619 = vpop.f32.mrb[0].mxu0
    %v620 = vadd.f32 0.0, %v619
    %v621 = vpop.f32.mrb[0].mxu0
    %622 = vmatprep.mubr.f32.mxu0 0.0
    %623 = vmatmul.mubr.f32.gmra.mrb[0].mxu0 %v434
    %v624 = vpop.f32.mrb[0].mxu0
    %v625 = vadd.f32 0.0, %v624
    %v626 = vpop.f32.mrb[0].mxu0
    %627 = vmatprep.mubr.f32.mxu0 0.0
    %628 = vmatmul.mubr.f32.gmra.mrb[0].mxu0 %v435
    %v629 = vpop.f32.mrb[0].mxu0
    %v630 = vadd.f32 0.0, %v629
    %v631 = vpop.f32.mrb[0].mxu0
    %632 = vmatprep.mubr.f32.mxu0 0.0
    %633 = vmatmul.mubr.f32.gmra.mrb[0].mxu0 %v436
    %v634 = vpop.f32.mrb[0].mxu0
    %v635 = vadd.f32 0.0, %v634
    %v636 = vpop.f32.mrb[0].mxu0
    %637 = vmatprep.mubr.f32.mxu0 0.0
    %638 = vmatmul.mubr.f32.gmra.mrb[0].mxu0 %v437
    %v639 = vpop.f32.mrb[0].mxu0
    %v640 = vadd.f32 0.0, %v639
    %v641 = vpop.f32.mrb[0].mxu0
    %642 = vmatprep.mubr.f32.mxu0 0.0
    %643 = vmatmul.mubr.f32.gmra.mrb[0].mxu0 %v438
    %v644 = vpop.f32.mrb[0].mxu0
    %v645 = vadd.f32 0.0, %v644
    %v646 = vpop.f32.mrb[0].mxu0
    %647 = vmatprep.mubr.f32.mxu0 0.0
    %648 = vmatmul.mubr.f32.gmra.mrb[0].mxu0 %v439
    %v649 = vpop.f32.mrb[0].mxu0
    %v650 = vadd.f32 0.0, %v649
    %v651 = vpop.f32.mrb[0].mxu0
    %652 = vmatprep.mubr.f32.mxu0 0.0
    %653 = vmatmul.mubr.f32.gmra.mrb[0].mxu0 %v440
    %v654 = vpop.f32.mrb[0].mxu0
    %v655 = vadd.f32 0.0, %v654
    %v656 = vpop.f32.mrb[0].mxu0
    %657 = vmatprep.mubr.f32.mxu0 0.0
    %658 = vmatmul.mubr.f32.gmra.mrb[0].mxu0 %v441
    %v659 = vpop.f32.mrb[0].mxu0
    %v660 = vadd.f32 0.0, %v659
    %v661 = vpop.f32.mrb[0].mxu0
    %662 = vmatprep.mubr.f32.mxu0 0.0
    %663 = vmatmul.mubr.f32.gmra.mrb[0].mxu0 %v442
    %v664 = vpop.f32.mrb[0].mxu0
    %v665 = vadd.f32 0.0, %v664
    %v666 = vpop.f32.mrb[0].mxu0
    %667 = vmatprep.mubr.f32.mxu0 0.0
    %668 = vmatmul.mubr.f32.gmra.mrb[0].mxu0 %v443
    %v669 = vpop.f32.mrb[0].mxu0
    %v670 = vadd.f32 0.0, %v669
    %v671 = vpop.f32.mrb[0].mxu0
    %672 = vmatprep.mubr.f32.mxu0 0.0
    %673 = vmatmul.mubr.f32.gmra.mrb[0].mxu0 %v444
    %v674 = vpop.f32.mrb[0].mxu0
    %v675 = vadd.f32 0.0, %v674
    %v676 = vpop.f32.mrb[0].mxu0
    %677 = vmatprep.mubr.f32.mxu0 0.0
    %678 = vmatmul.mubr.f32.gmra.mrb[0].mxu0 %v445
    %v679 = vpop.f32.mrb[0].mxu0
    %v680 = vadd.f32 0.0, %v679
    %v681 = vpop.f32.mrb[0].mxu0
    %682 = vmatprep.mubr.f32.mxu0 0.0
    %683 = vmatmul.mubr.f32.gmra.mrb[0].mxu0 %v446
    %v684 = vpop.f32.mrb[0].mxu0
    %v685 = vadd.f32 0.0, %v684
    %v686 = vpop.f32.mrb[0].mxu0
    %687 = vdwg.mxu0
    %688 = vst [vmem:[#allocation14] sm:$0xff] %v530
    %689 = vst [vmem:[#allocation14 + $0x8] sm:$0xff] %v535
    %690 = vst [vmem:[#allocation14 + $0x10] sm:$0xff] %v540
    %691 = vst [vmem:[#allocation14 + $0x18] sm:$0xff] %v545
    %692 = vst [vmem:[#allocation14 + $0x20] sm:$0xff] %v550
    %693 = vst [vmem:[#allocation14 + $0x28] sm:$0xff] %v555
    %694 = vst [vmem:[#allocation14 + $0x30] sm:$0xff] %v560
    %695 = vst [vmem:[#allocation14 + $0x38] sm:$0xff] %v565
    %696 = vst [vmem:[#allocation14 + $0x40] sm:$0xff] %v570
    %697 = vst [vmem:[#allocation14 + $0x48] sm:$0xff] %v575
    %698 = vst [vmem:[#allocation14 + $0x50] sm:$0xff] %v580
    %699 = vst [vmem:[#allocation14 + $0x58] sm:$0xff] %v585
    %700 = vst [vmem:[#allocation14 + $0x60] sm:$0xff] %v590
    %701 = vst [vmem:[#allocation14 + $0x68] sm:$0xff] %v595
    %702 = vst [vmem:[#allocation14 + $0x70] sm:$0xff] %v600
    %703 = vst [vmem:[#allocation14 + $0x78] sm:$0xff] %v605
    %704 = vst [vmem:[#allocation14 + $0x80] sm:$0xff] %v610
    %705 = vst [vmem:[#allocation14 + $0x88] sm:$0xff] %v615
    %706 = vst [vmem:[#allocation14 + $0x90] sm:$0xff] %v620
    %707 = vst [vmem:[#allocation14 + $0x98] sm:$0xff] %v625
    %708 = vst [vmem:[#allocation14 + $0xa0] sm:$0xff] %v630
    %709 = vst [vmem:[#allocation14 + $0xa8] sm:$0xff] %v635
    %710 = vst [vmem:[#allocation14 + $0xb0] sm:$0xff] %v640
    %711 = vst [vmem:[#allocation14 + $0xb8] sm:$0xff] %v645
    %712 = vst [vmem:[#allocation14 + $0xc0] sm:$0xff] %v650
    %713 = vst [vmem:[#allocation14 + $0xc8] sm:$0xff] %v655
    %714 = vst [vmem:[#allocation14 + $0xd0] sm:$0xff] %v660
    %715 = vst [vmem:[#allocation14 + $0xd8] sm:$0xff] %v665
    %716 = vst [vmem:[#allocation14 + $0xe0] sm:$0xff] %v670
    %717 = vst [vmem:[#allocation14 + $0xe8] sm:$0xff] %v675
    %718 = vst [vmem:[#allocation14 + $0xf0] sm:$0xff] %v680
    %719 = vst [vmem:[#allocation14 + $0xf8] sm:$0xff] %v685
    %v720 = vld [vmem:[#allocation7] sm:$0xff]
    %v721 = vld [vmem:[#allocation7 + $0x8] sm:$0xff]
    %v722 = vld [vmem:[#allocation7 + $0x10] sm:$0xff]
    %v723 = vld [vmem:[#allocation7 + $0x18] sm:$0xff]
    %v724 = vld [vmem:[#allocation7 + $0x20] sm:$0xff]
    %v725 = vld [vmem:[#allocation7 + $0x28] sm:$0xff]
    %v726 = vld [vmem:[#allocation7 + $0x30] sm:$0xff]
    %v727 = vld [vmem:[#allocation7 + $0x38] sm:$0xff]
    %v728 = vld [vmem:[#allocation7 + $0x40] sm:$0xff]
    %v729 = vld [vmem:[#allocation7 + $0x48] sm:$0xff]
    %v730 = vld [vmem:[#allocation7 + $0x50] sm:$0xff]
    %v731 = vld [vmem:[#allocation7 + $0x58] sm:$0xff]
    %v732 = vld [vmem:[#allocation7 + $0x60] sm:$0xff]
    %v733 = vld [vmem:[#allocation7 + $0x68] sm:$0xff]
    %v734 = vld [vmem:[#allocation7 + $0x70] sm:$0xff]
    %v735 = vld [vmem:[#allocation7 + $0x78] sm:$0xff]
    %v736 = vld [vmem:[#allocation7 + $0x80] sm:$0xff]
    %v737 = vld [vmem:[#allocation7 + $0x88] sm:$0xff]
    %v738 = vld [vmem:[#allocation7 + $0x90] sm:$0xff]
    %v739 = vld [vmem:[#allocation7 + $0x98] sm:$0xff]
    %v740 = vld [vmem:[#allocation7 + $0xa0] sm:$0xff]
    %v741 = vld [vmem:[#allocation7 + $0xa8] sm:$0xff]
    %v742 = vld [vmem:[#allocation7 + $0xb0] sm:$0xff]
    %v743 = vld [vmem:[#allocation7 + $0xb8] sm:$0xff]
    %v744 = vld [vmem:[#allocation7 + $0xc0] sm:$0xff]
    %v745 = vld [vmem:[#allocation7 + $0xc8] sm:$0xff]
    %v746 = vld [vmem:[#allocation7 + $0xd0] sm:$0xff]
    %v747 = vld [vmem:[#allocation7 + $0xd8] sm:$0xff]
    %v748 = vld [vmem:[#allocation7 + $0xe0] sm:$0xff]
    %v749 = vld [vmem:[#allocation7 + $0xe8] sm:$0xff]
    %v750 = vld [vmem:[#allocation7 + $0xf0] sm:$0xff]
    %v751 = vld [vmem:[#allocation7 + $0xf8] sm:$0xff]
    %v752 = vld [vmem:[#allocation11] sm:$0xff]
    %v753 = vld [vmem:[#allocation11 + $0x8] sm:$0xff]
    %v754 = vld [vmem:[#allocation11 + $0x10] sm:$0xff]
    %v755 = vld [vmem:[#allocation11 + $0x18] sm:$0xff]
    %v756 = vld [vmem:[#allocation11 + $0x20] sm:$0xff]
    %v757 = vld [vmem:[#allocation11 + $0x28] sm:$0xff]
    %v758 = vld [vmem:[#allocation11 + $0x30] sm:$0xff]
    %v759 = vld [vmem:[#allocation11 + $0x38] sm:$0xff]
    %v760 = vld [vmem:[#allocation11 + $0x40] sm:$0xff]
    %v761 = vld [vmem:[#allocation11 + $0x48] sm:$0xff]
    %v762 = vld [vmem:[#allocation11 + $0x50] sm:$0xff]
    %v763 = vld [vmem:[#allocation11 + $0x58] sm:$0xff]
    %v764 = vld [vmem:[#allocation11 + $0x60] sm:$0xff]
    %v765 = vld [vmem:[#allocation11 + $0x68] sm:$0xff]
    %v766 = vld [vmem:[#allocation11 + $0x70] sm:$0xff]
    %v767 = vld [vmem:[#allocation11 + $0x78] sm:$0xff]
    %768 = vmatprep.subr.mxu0 0.0
    %769 = vmatpush1.msra.mxu0 %v752
    %770 = vmatprep.subr.mxu0 0.0
    %771 = vmatpush1.msra.mxu0 %v753
    %772 = vmatprep.subr.mxu0 0.0
    %773 = vmatpush1.msra.mxu0 %v754
    %774 = vmatprep.subr.mxu0 0.0
    %775 = vmatpush1.msra.mxu0 %v755
    %776 = vmatprep.subr.mxu0 0.0
    %777 = vmatpush1.msra.mxu0 %v756
    %778 = vmatprep.subr.mxu0 0.0
    %779 = vmatpush1.msra.mxu0 %v757
    %780 = vmatprep.subr.mxu0 0.0
    %781 = vmatpush1.msra.mxu0 %v758
    %782 = vmatprep.subr.mxu0 0.0
    %783 = vmatpush1.msra.mxu0 %v759
    %784 = vmatprep.subr.mxu0 0.0
    %785 = vmatpush1.msra.mxu0 %v760
    %786 = vmatprep.subr.mxu0 0.0
    %787 = vmatpush1.msra.mxu0 %v761
    %788 = vmatprep.subr.mxu0 0.0
    %789 = vmatpush1.msra.mxu0 %v762
    %790 = vmatprep.subr.mxu0 0.0
    %791 = vmatpush1.msra.mxu0 %v763
    %792 = vmatprep.subr.mxu0 0.0
    %793 = vmatpush1.msra.mxu0 %v764
    %794 = vmatprep.subr.mxu0 0.0
    %795 = vmatpush1.msra.mxu0 %v765
    %796 = vmatprep.subr.mxu0 0.0
    %797 = vmatpush1.msra.mxu0 %v766
    %798 = vmatprep.subr.mxu0 0.0
    %799 = vmatpush1.msra.mxu0 %v767
    %800 = vmatprep.subr.mxu0 0.0
    %801 = vmatpush1.msra.mxu0 0.0
    %802 = vmatprep.subr.mxu0 0.0
    %803 = vmatpush1.msra.mxu0 0.0
    %804 = vmatprep.subr.mxu0 0.0
    %805 = vmatpush1.msra.mxu0 0.0
    %806 = vmatprep.subr.mxu0 0.0
    %807 = vmatpush1.msra.mxu0 0.0
    %808 = vmatprep.subr.mxu0 0.0
    %809 = vmatpush1.msra.mxu0 0.0
    %810 = vmatprep.subr.mxu0 0.0
    %811 = vmatpush1.msra.mxu0 0.0
    %812 = vmatprep.subr.mxu0 0.0
    %813 = vmatpush1.msra.mxu0 0.0
    %814 = vmatprep.subr.mxu0 0.0
    %815 = vmatpush1.msra.mxu0 0.0
    %816 = vmatprep.subr.mxu0 0.0
    %817 = vmatpush1.msra.mxu0 0.0
    %818 = vmatprep.subr.mxu0 0.0
    %819 = vmatpush1.msra.mxu0 0.0
    %820 = vmatprep.subr.mxu0 0.0
    %821 = vmatpush1.msra.mxu0 0.0
    %822 = vmatprep.subr.mxu0 0.0
    %823 = vmatpush1.msra.mxu0 0.0
    %824 = vmatprep.subr.mxu0 0.0
    %825 = vmatpush1.msra.mxu0 0.0
    %826 = vmatprep.subr.mxu0 0.0
    %827 = vmatpush1.msra.mxu0 0.0
    %828 = vmatprep.subr.mxu0 0.0
    %829 = vmatpush1.msra.mxu0 0.0
    %830 = vmatprep.subr.mxu0 0.0
    %831 = vmatpush1.msra.mxu0 0.0
    %832 = vmatprep.mubr.f32.mxu0 0.0
    %833 = vmatmul.mubr.f32.gmra.mrb[0].mxu0 %v720
    %v834 = vpop.f32.mrb[0].mxu0
    %v835 = vadd.f32 0.0, %v834
    %v836 = vpop.f32.mrb[0].mxu0
    %837 = vmatprep.mubr.f32.mxu0 0.0
    %838 = vmatmul.mubr.f32.gmra.mrb[0].mxu0 %v721
    %v839 = vpop.f32.mrb[0].mxu0
    %v840 = vadd.f32 0.0, %v839
    %v841 = vpop.f32.mrb[0].mxu0
    %842 = vmatprep.mubr.f32.mxu0 0.0
    %843 = vmatmul.mubr.f32.gmra.mrb[0].mxu0 %v722
    %v844 = vpop.f32.mrb[0].mxu0
    %v845 = vadd.f32 0.0, %v844
    %v846 = vpop.f32.mrb[0].mxu0
    %847 = vmatprep.mubr.f32.mxu0 0.0
    %848 = vmatmul.mubr.f32.gmra.mrb[0].mxu0 %v723
    %v849 = vpop.f32.mrb[0].mxu0
    %v850 = vadd.f32 0.0, %v849
    %v851 = vpop.f32.mrb[0].mxu0
    %852 = vmatprep.mubr.f32.mxu0 0.0
    %853 = vmatmul.mubr.f32.gmra.mrb[0].mxu0 %v724
    %v854 = vpop.f32.mrb[0].mxu0
    %v855 = vadd.f32 0.0, %v854
    %v856 = vpop.f32.mrb[0].mxu0
    %857 = vmatprep.mubr.f32.mxu0 0.0
    %858 = vmatmul.mubr.f32.gmra.mrb[0].mxu0 %v725
    %v859 = vpop.f32.mrb[0].mxu0
    %v860 = vadd.f32 0.0, %v859
    %v861 = vpop.f32.mrb[0].mxu0
    %862 = vmatprep.mubr.f32.mxu0 0.0
    %863 = vmatmul.mubr.f32.gmra.mrb[0].mxu0 %v726
    %v864 = vpop.f32.mrb[0].mxu0
    %v865 = vadd.f32 0.0, %v864
    %v866 = vpop.f32.mrb[0].mxu0
    %867 = vmatprep.mubr.f32.mxu0 0.0
    %868 = vmatmul.mubr.f32.gmra.mrb[0].mxu0 %v727
    %v869 = vpop.f32.mrb[0].mxu0
    %v870 = vadd.f32 0.0, %v869
    %v871 = vpop.f32.mrb[0].mxu0
    %872 = vmatprep.mubr.f32.mxu0 0.0
    %873 = vmatmul.mubr.f32.gmra.mrb[0].mxu0 %v728
    %v874 = vpop.f32.mrb[0].mxu0
    %v875 = vadd.f32 0.0, %v874
    %v876 = vpop.f32.mrb[0].mxu0
    %877 = vmatprep.mubr.f32.mxu0 0.0
    %878 = vmatmul.mubr.f32.gmra.mrb[0].mxu0 %v729
    %v879 = vpop.f32.mrb[0].mxu0
    %v880 = vadd.f32 0.0, %v879
    %v881 = vpop.f32.mrb[0].mxu0
    %882 = vmatprep.mubr.f32.mxu0 0.0
    %883 = vmatmul.mubr.f32.gmra.mrb[0].mxu0 %v730
    %v884 = vpop.f32.mrb[0].mxu0
    %v885 = vadd.f32 0.0, %v884
    %v886 = vpop.f32.mrb[0].mxu0
    %887 = vmatprep.mubr.f32.mxu0 0.0
    %888 = vmatmul.mubr.f32.gmra.mrb[0].mxu0 %v731
    %v889 = vpop.f32.mrb[0].mxu0
    %v890 = vadd.f32 0.0, %v889
    %v891 = vpop.f32.mrb[0].mxu0
    %892 = vmatprep.mubr.f32.mxu0 0.0
    %893 = vmatmul.mubr.f32.gmra.mrb[0].mxu0 %v732
    %v894 = vpop.f32.mrb[0].mxu0
    %v895 = vadd.f32 0.0, %v894
    %v896 = vpop.f32.mrb[0].mxu0
    %897 = vmatprep.mubr.f32.mxu0 0.0
    %898 = vmatmul.mubr.f32.gmra.mrb[0].mxu0 %v733
    %v899 = vpop.f32.mrb[0].mxu0
    %v900 = vadd.f32 0.0, %v899
    %v901 = vpop.f32.mrb[0].mxu0
    %902 = vmatprep.mubr.f32.mxu0 0.0
    %903 = vmatmul.mubr.f32.gmra.mrb[0].mxu0 %v734
    %v904 = vpop.f32.mrb[0].mxu0
    %v905 = vadd.f32 0.0, %v904
    %v906 = vpop.f32.mrb[0].mxu0
    %907 = vmatprep.mubr.f32.mxu0 0.0
    %908 = vmatmul.mubr.f32.gmra.mrb[0].mxu0 %v735
    %v909 = vpop.f32.mrb[0].mxu0
    %v910 = vadd.f32 0.0, %v909
    %v911 = vpop.f32.mrb[0].mxu0
    %912 = vmatprep.mubr.f32.mxu0 0.0
    %913 = vmatmul.mubr.f32.gmra.mrb[0].mxu0 %v736
    %v914 = vpop.f32.mrb[0].mxu0
    %v915 = vadd.f32 0.0, %v914
    %v916 = vpop.f32.mrb[0].mxu0
    %917 = vmatprep.mubr.f32.mxu0 0.0
    %918 = vmatmul.mubr.f32.gmra.mrb[0].mxu0 %v737
    %v919 = vpop.f32.mrb[0].mxu0
    %v920 = vadd.f32 0.0, %v919
    %v921 = vpop.f32.mrb[0].mxu0
    %922 = vmatprep.mubr.f32.mxu0 0.0
    %923 = vmatmul.mubr.f32.gmra.mrb[0].mxu0 %v738
    %v924 = vpop.f32.mrb[0].mxu0
    %v925 = vadd.f32 0.0, %v924
    %v926 = vpop.f32.mrb[0].mxu0
    %927 = vmatprep.mubr.f32.mxu0 0.0
    %928 = vmatmul.mubr.f32.gmra.mrb[0].mxu0 %v739
    %v929 = vpop.f32.mrb[0].mxu0
    %v930 = vadd.f32 0.0, %v929
    %v931 = vpop.f32.mrb[0].mxu0
    %932 = vmatprep.mubr.f32.mxu0 0.0
    %933 = vmatmul.mubr.f32.gmra.mrb[0].mxu0 %v740
    %v934 = vpop.f32.mrb[0].mxu0
    %v935 = vadd.f32 0.0, %v934
    %v936 = vpop.f32.mrb[0].mxu0
    %937 = vmatprep.mubr.f32.mxu0 0.0
    %938 = vmatmul.mubr.f32.gmra.mrb[0].mxu0 %v741
    %v939 = vpop.f32.mrb[0].mxu0
    %v940 = vadd.f32 0.0, %v939
    %v941 = vpop.f32.mrb[0].mxu0
    %942 = vmatprep.mubr.f32.mxu0 0.0
    %943 = vmatmul.mubr.f32.gmra.mrb[0].mxu0 %v742
    %v944 = vpop.f32.mrb[0].mxu0
    %v945 = vadd.f32 0.0, %v944
    %v946 = vpop.f32.mrb[0].mxu0
    %947 = vmatprep.mubr.f32.mxu0 0.0
    %948 = vmatmul.mubr.f32.gmra.mrb[0].mxu0 %v743
    %v949 = vpop.f32.mrb[0].mxu0
    %v950 = vadd.f32 0.0, %v949
    %v951 = vpop.f32.mrb[0].mxu0
    %952 = vmatprep.mubr.f32.mxu0 0.0
    %953 = vmatmul.mubr.f32.gmra.mrb[0].mxu0 %v744
    %v954 = vpop.f32.mrb[0].mxu0
    %v955 = vadd.f32 0.0, %v954
    %v956 = vpop.f32.mrb[0].mxu0
    %957 = vmatprep.mubr.f32.mxu0 0.0
    %958 = vmatmul.mubr.f32.gmra.mrb[0].mxu0 %v745
    %v959 = vpop.f32.mrb[0].mxu0
    %v960 = vadd.f32 0.0, %v959
    %v961 = vpop.f32.mrb[0].mxu0
    %962 = vmatprep.mubr.f32.mxu0 0.0
    %963 = vmatmul.mubr.f32.gmra.mrb[0].mxu0 %v746
    %v964 = vpop.f32.mrb[0].mxu0
    %v965 = vadd.f32 0.0, %v964
    %v966 = vpop.f32.mrb[0].mxu0
    %967 = vmatprep.mubr.f32.mxu0 0.0
    %968 = vmatmul.mubr.f32.gmra.mrb[0].mxu0 %v747
    %v969 = vpop.f32.mrb[0].mxu0
    %v970 = vadd.f32 0.0, %v969
    %v971 = vpop.f32.mrb[0].mxu0
    %972 = vmatprep.mubr.f32.mxu0 0.0
    %973 = vmatmul.mubr.f32.gmra.mrb[0].mxu0 %v748
    %v974 = vpop.f32.mrb[0].mxu0
    %v975 = vadd.f32 0.0, %v974
    %v976 = vpop.f32.mrb[0].mxu0
    %977 = vmatprep.mubr.f32.mxu0 0.0
    %978 = vmatmul.mubr.f32.gmra.mrb[0].mxu0 %v749
    %v979 = vpop.f32.mrb[0].mxu0
    %v980 = vadd.f32 0.0, %v979
    %v981 = vpop.f32.mrb[0].mxu0
    %982 = vmatprep.mubr.f32.mxu0 0.0
    %983 = vmatmul.mubr.f32.gmra.mrb[0].mxu0 %v750
    %v984 = vpop.f32.mrb[0].mxu0
    %v985 = vadd.f32 0.0, %v984
    %v986 = vpop.f32.mrb[0].mxu0
    %987 = vmatprep.mubr.f32.mxu0 0.0
    %988 = vmatmul.mubr.f32.gmra.mrb[0].mxu0 %v751
    %v989 = vpop.f32.mrb[0].mxu0
    %v990 = vadd.f32 0.0, %v989
    %v991 = vpop.f32.mrb[0].mxu0
    %992 = vdwg.mxu0
    %993 = vst [vmem:[#allocation16] sm:$0xff] %v835
    %994 = vst [vmem:[#allocation16 + $0x8] sm:$0xff] %v840
    %995 = vst [vmem:[#allocation16 + $0x10] sm:$0xff] %v845
    %996 = vst [vmem:[#allocation16 + $0x18] sm:$0xff] %v850
    %997 = vst [vmem:[#allocation16 + $0x20] sm:$0xff] %v855
    %998 = vst [vmem:[#allocation16 + $0x28] sm:$0xff] %v860
    %999 = vst [vmem:[#allocation16 + $0x30] sm:$0xff] %v865
    %1000 = vst [vmem:[#allocation16 + $0x38] sm:$0xff] %v870
    %1001 = vst [vmem:[#allocation16 + $0x40] sm:$0xff] %v875
    %1002 = vst [vmem:[#allocation16 + $0x48] sm:$0xff] %v880
    %1003 = vst [vmem:[#allocation16 + $0x50] sm:$0xff] %v885
    %1004 = vst [vmem:[#allocation16 + $0x58] sm:$0xff] %v890
    %1005 = vst [vmem:[#allocation16 + $0x60] sm:$0xff] %v895
    %1006 = vst [vmem:[#allocation16 + $0x68] sm:$0xff] %v900
    %1007 = vst [vmem:[#allocation16 + $0x70] sm:$0xff] %v905
    %1008 = vst [vmem:[#allocation16 + $0x78] sm:$0xff] %v910
    %1009 = vst [vmem:[#allocation16 + $0x80] sm:$0xff] %v915
    %1010 = vst [vmem:[#allocation16 + $0x88] sm:$0xff] %v920
    %1011 = vst [vmem:[#allocation16 + $0x90] sm:$0xff] %v925
    %1012 = vst [vmem:[#allocation16 + $0x98] sm:$0xff] %v930
    %1013 = vst [vmem:[#allocation16 + $0xa0] sm:$0xff] %v935
    %1014 = vst [vmem:[#allocation16 + $0xa8] sm:$0xff] %v940
    %1015 = vst [vmem:[#allocation16 + $0xb0] sm:$0xff] %v945
    %1016 = vst [vmem:[#allocation16 + $0xb8] sm:$0xff] %v950
    %1017 = vst [vmem:[#allocation16 + $0xc0] sm:$0xff] %v955
    %1018 = vst [vmem:[#allocation16 + $0xc8] sm:$0xff] %v960
    %1019 = vst [vmem:[#allocation16 + $0xd0] sm:$0xff] %v965
    %1020 = vst [vmem:[#allocation16 + $0xd8] sm:$0xff] %v970
    %1021 = vst [vmem:[#allocation16 + $0xe0] sm:$0xff] %v975
    %1022 = vst [vmem:[#allocation16 + $0xe8] sm:$0xff] %v980
    %1023 = vst [vmem:[#allocation16 + $0xf0] sm:$0xff] %v985
    %1024 = vst [vmem:[#allocation16 + $0xf8] sm:$0xff] %v990
    // Predicated region
    $region50: #{tpu_custom_call.1} parent=1 // pred_check
      _
    $region51: #{tpu_custom_call.1} parent=1 // pred_check_branch
      %1026 = sbr.rel (0) target = $region53
    $region52: #{tpu_custom_call.1} parent=1 // pred_region
      %s1028 = ssub.s32 4096, 4096
      %1029 = vsyncadd [#allocation4], %s1028
      %s1030 = sshll.u32 [#allocation13], 4
      %s1031 = int_to_ptr.vmem [resolvable:$true] %s1030
      %1036 = dma.vmem_to_hbm [thread:$0]  %s1031, 4096, %s6, [#allocation4], 128, 128, 8
    $region53: #{tpu_custom_call.1} parent=1 // pred_fallthru
      _
    // Predicated region
    $region54: #{tpu_custom_call.1} parent=1 // pred_check
      _
    $region55: #{tpu_custom_call.1} parent=1 // pred_check_branch
      %1038 = sbr.rel (0) target = $region57
    $region56: #{tpu_custom_call.1} parent=1 // pred_region
      %s1040 = ssub.s32 4096, 4096
      %1041 = vsyncadd [#allocation15], %s1040
      %s1042 = sshll.u32 [#allocation14], 4
      %s1043 = int_to_ptr.vmem [resolvable:$true] %s1042
      %1048 = dma.vmem_to_hbm [thread:$0]  %s1043, 4096, %s7, [#allocation15], 128, 128, 8
    $region57: #{tpu_custom_call.1} parent=1 // pred_fallthru
      _
    // Predicated region
    $region58: #{tpu_custom_call.1} parent=1 // pred_check
      _
    $region59: #{tpu_custom_call.1} parent=1 // pred_check_branch
      %1050 = sbr.rel (0) target = $region61
    $region60: #{tpu_custom_call.1} parent=1 // pred_region
      %s1052 = ssub.s32 4096, 4096
      %1053 = vsyncadd [#allocation15], %s1052
      %s1054 = sshll.u32 [#allocation16], 4
      %s1055 = int_to_ptr.vmem [resolvable:$true] %s1054
      %1060 = dma.vmem_to_hbm [thread:$0]  %s1055, 4096, %s8, [#allocation15], 128, 128, 8
    $region61: #{tpu_custom_call.1} parent=1 // pred_fallthru
      _
    // Predicated region
    $region62: #{tpu_custom_call.1} parent=1 // pred_check
      _
    $region63: #{tpu_custom_call.1} parent=1 // pred_check_branch
      %1062 = sbr.rel (0) target = $region65
    $region64: #{tpu_custom_call.1} parent=1 // pred_region
      %1063 = dma.done [#allocation4], 4096
    $region65: #{tpu_custom_call.1} parent=1 // pred_fallthru
      _
    // Predicated region
    $region66: #{tpu_custom_call.1} parent=1 // pred_check
      _
    $region67: #{tpu_custom_call.1} parent=1 // pred_check_branch
      %1065 = sbr.rel (0) target = $region69
    $region68: #{tpu_custom_call.1} parent=1 // pred_region
      %1066 = dma.done [#allocation15], 4096
    $region69: #{tpu_custom_call.1} parent=1 // pred_fallthru
      _
    // Predicated region
    $region70: #{tpu_custom_call.1} parent=1 // pred_check
      _
    $region71: #{tpu_custom_call.1} parent=1 // pred_check_branch
      %1068 = sbr.rel (0) target = $region73
    $region72: #{tpu_custom_call.1} parent=1 // pred_region
      %1069 = dma.done [#allocation15], 4096
    $region73: #{tpu_custom_call.1} parent=1 // pred_fallthru
      _
    %1070 = vsyncpa [#allocation3], 1
    %1071 = vsyncpa [#allocation6], 1
    %1072 = vsyncpa [#allocation9], 1
    %1073 = vsyncpa [#allocation12], 1
    %1074 = vsyncpa [#allocation4], 1
    %1075 = vsyncpa [#allocation15], 1

</llo_original>
